<compile_context>
chip_gen: v5e
topology: v5e:2x2
jax: 0.10.0
libtpu: 0.0.40
codegen_flags: <defaults>
</compile_context>

<pallas_src>
import functools

import jax
import jax.numpy as jnp
import numpy as np
from jax import lax
from jax.experimental import pallas as pl
from jax.experimental.pallas import tpu as pltpu

FLOW_KEYFRAMES = 4       # kwargs['system'].dm.train_dataset.num_keyframes
TOTAL_FRAMES = 32        # kwargs['system'].dm.train_dataset.num_frames (unused w/o jitter)
EPS = 1e-8               # theta^2 threshold (theta < 1e-4) for the Taylor fallback
_MIN_GRID_STEPS = 8      # >= 4 pipelined steps per TensorCore when axis splits on v7x


# ----------------------------- hardware-aware knobs ---------------------------
def _row_chunk(P):
    """Rows per inner compute chunk: keep each (chunk, P) f32 temporary at
    <= ~2 vregs so the ~25 live Rodrigues temporaries fit the 64-vreg file
    (no spill vld/vst competing with the HBM stream on the 1-vst-slot chips)."""
    return int(max(8, min(16, ((16 * 128) // max(P, 1)) // 8 * 8)))


def _vmem_limit_bytes():
    cap = 64 << 20   # conservative default: v7x physical VMEM per TensorCore
    try:
        info = pltpu.get_tpu_info()
        cap = int(getattr(info, "vmem_capacity_bytes", cap)) or cap
    except Exception:
        pass
    # ~48 MiB on v7x (64 MiB phys), ~96 MiB on v5e/v6e (128 MiB phys)
    return int(min(cap * 3 // 4, 96 << 20))


def _choose_tile_n(N, P, in_itemsize, out_itemsize, chunk, *,
                   requested=None, vmem_budget_bytes=None):
    """Ray-tile size: as large as the generation-aware, dtype-aware,
    double-buffered VMEM budget allows (this kernel is HBM-bound and the
    ~0.35 us/step pipeline overhead dominates small tiles), while keeping
    >= _MIN_GRID_STEPS grid steps so the pipeline overlaps and the 'parallel'
    axis shards across both v7x TensorCores."""
    if vmem_budget_bytes is None:
        vmem_budget_bytes = _vmem_limit_bytes() // 2     # headroom for scratch
    # 12 input + 6 output channels of (tile, P), double-buffered, + dt block.
    bytes_per_row = 2 * (12 * P * in_itemsize + 6 * P * out_itemsize + 128 * 4)
    cap = max(chunk, int(vmem_budget_bytes) // bytes_per_row)
    target = 1024 if requested is None else requested
    tile = min(target, cap, max(chunk, N))
    if N > chunk * _MIN_GRID_STEPS:
        tile = min(tile, N // _MIN_GRID_STEPS)
    tile = max(chunk, (tile // chunk) * chunk)           # multiple of row-chunk
    # Prefer a nearby divisor of N (no padding); otherwise the caller pads N —
    # never fall back to a whole-axis block that could blow the VMEM budget.
    t = tile
    while t >= max(chunk, tile // 2):
        if N % t == 0:
            return t
        t -= chunk
    return tile


# ----------------------------- Pallas kernel ----------------------------------
def _advect_kernel(dt_ref, pts_ref, aflow_ref, sflow_ref,
                   pts_out_ref, off_out_ref, *, chunk):
    f32 = jnp.float32
    tn, P = pts_ref.shape[1], pts_ref.shape[2]
    out_dt = pts_out_ref.dtype
    n_chunks = tn // chunk

    # Two-level structure: each grid step DMAs one big (C, tile, P) block
    # (amortizes per-step pipeline overhead, large contiguous DMAs); this
    # inner loop walks the already-resident block in small row chunks so live
    # ranges stay inside the vector register file.
    @pl.loop(0, n_chunks)
    def _(c):
        r = pl.multiple_of(c * chunk, chunk)
        rows = pl.ds(r, chunk)

        # per-ray dt: lane-broadcast ONCE per chunk (6 reuses below)
        dt = jnp.broadcast_to(dt_ref[rows, :].astype(f32), (chunk, P))

        px = pts_ref[0, rows, :].astype(f32)
        py = pts_ref[1, rows, :].astype(f32)
        pz = pts_ref[2, rows, :].astype(f32)
        ax = aflow_ref[3, rows, :].astype(f32)          # angular anchor
        ay = aflow_ref[4, rows, :].astype(f32)
        az = aflow_ref[5, rows, :].astype(f32)

        # scaled axis-angle: v = angular_flow_rot * time_offset
        vx = aflow_ref[0, rows, :].astype(f32) * dt
        vy = aflow_ref[1, rows, :].astype(f32) * dt
        vz = aflow_ref[2, rows, :].astype(f32) * dt

        theta2 = vx * vx + vy * vy + vz * vz
        small = theta2 < EPS
        safe_t2 = jnp.where(small, 1.0, theta2)
        rtheta = lax.rsqrt(safe_t2)                     # EUP; replaces sqrt + 2 divides
        theta = safe_t2 * rtheta
        # Rodrigues coefficients with small-angle Taylor fallback
        A = jnp.where(small, 1.0 - theta2 * (1.0 / 6.0), jnp.sin(theta) * rtheta)
        B = jnp.where(small, 0.5 - theta2 * (1.0 / 24.0),
                      (1.0 - jnp.cos(theta)) * (rtheta * rtheta))

        # q = p - anchor; c1 = v x q; c2 = v x (v x q)
        qx, qy, qz = px - ax, py - ay, pz - az
        c1x = vy * qz - vz * qy
        c1y = vz * qx - vx * qz
        c1z = vx * qy - vy * qx
        c2x = vy * c1z - vz * c1y
        c2y = vz * c1x - vx * c1z
        c2z = vx * c1y - vy * c1x

        # R q + anchor + s*dt = p + upd with upd = A c1 + B c2 + s*dt, and
        # offset = p_in - p_out = -upd exactly (no px-nx cancellation in bf16).
        ux = A * c1x + B * c2x + sflow_ref[0, rows, :].astype(f32) * dt
        uy = A * c1y + B * c2y + sflow_ref[1, rows, :].astype(f32) * dt
        uz = A * c1z + B * c2z + sflow_ref[2, rows, :].astype(f32) * dt

        pts_out_ref[0, rows, :] = (px + ux).astype(out_dt)
        pts_out_ref[1, rows, :] = (py + uy).astype(out_dt)
        pts_out_ref[2, rows, :] = (pz + uz).astype(out_dt)
        off_out_ref[0, rows, :] = (-ux).astype(out_dt)
        off_out_ref[1, rows, :] = (-uy).astype(out_dt)
        off_out_ref[2, rows, :] = (-uz).astype(out_dt)


# ----------------------------- core entry point -------------------------------
def advect_points_component_major(time_offset, points_cm, angular_flow_cm,
                                  spatial_flow_cm, *, tile_n=None):
    """Component-major fast path (preferred in-model layout).

    time_offset:      (N, 1)  per-ray (t - base_t)
    points_cm:        (3, N, P)
    angular_flow_cm:  (6, N, P)   [:3] axis-angle rate, [3:6] rotation anchor
    spatial_flow_cm:  (3, N, P)
    returns (advected_points_cm, offset_cm), each (3, N, P) in points dtype.
    """
    _, N, P = points_cm.shape
    out_dtype = points_cm.dtype
    chunk = _row_chunk(P)
    tile = _choose_tile_n(N, P, points_cm.dtype.itemsize,
                          jnp.dtype(out_dtype).itemsize, chunk,
                          requested=tile_n)

    # Pad N up to a multiple of the tile (never fall back to a whole-axis block).
    n_pad = (-N) % tile
    if n_pad:
        time_offset = jnp.pad(time_offset, ((0, n_pad), (0, 0)))
        points_cm = jnp.pad(points_cm, ((0, 0), (0, n_pad), (0, 0)))
        angular_flow_cm = jnp.pad(angular_flow_cm, ((0, 0), (0, n_pad), (0, 0)))
        spatial_flow_cm = jnp.pad(spatial_flow_cm, ((0, 0), (0, n_pad), (0, 0)))
    Np = N + n_pad

    kernel = functools.partial(_advect_kernel, chunk=chunk)
    # NOTE: only if xprof shows exposed DMA at these tile sizes, add
    # pipeline_mode=pl.Buffered(3) on the (6, tile, P) angular-flow spec and
    # re-budget the tile for the extra ~50% VMEM it costs (matters on v7x).
    # TODO(synk): callers that already hold a stacked (12, N, P) input / want a
    # stacked (6, N, P) output can fuse the DMA streams further (3 instead of 6).
    pts_new, off = pl.pallas_call(
        kernel,
        grid_spec=pltpu.PrefetchScalarGridSpec(
            num_scalar_prefetch=0,
            grid=(Np // tile,),
            in_specs=[
                pl.BlockSpec((tile, 1), lambda i: (i, 0)),
                pl.BlockSpec((3, tile, P), lambda i: (0, i, 0)),
                pl.BlockSpec((6, tile, P), lambda i: (0, i, 0)),
                pl.BlockSpec((3, tile, P), lambda i: (0, i, 0)),
            ],
            out_specs=[
                pl.BlockSpec((3, tile, P), lambda i: (0, i, 0)),
                pl.BlockSpec((3, tile, P), lambda i: (0, i, 0)),
            ],
        ),
        out_shape=[
            jax.ShapeDtypeStruct((3, Np, P), out_dtype),   # advected points
            jax.ShapeDtypeStruct((3, Np, P), out_dtype),   # offset = in - out
        ],
        compiler_params=pltpu.CompilerParams(
            dimension_semantics=("parallel",),             # shards across v7x TCs
            vmem_limit_bytes=_vmem_limit_bytes(),
        ),
    )(time_offset.astype(jnp.float32), points_cm, angular_flow_cm, spatial_flow_cm)

    if n_pad:
        pts_new = pts_new[:, :N]
        off = off[:, :N]
    return pts_new, off


# --------------------- module-semantics compatibility wrapper -----------------
def advect_points_embedding(rays, points, angular_flow, spatial_flow,
                            flow_keyframes=FLOW_KEYFRAMES, tile_n=None):
    """Mirrors AdvectPointsEmbedding.forward with use_angular_flow=True,
    use_spatial_flow=True, identity activations, eval mode (no jitter).
    rays: (N, RC) with time in the last channel; points: (N, P, 3);
    angular_flow: (N, P, 6); spatial_flow: (N, P, 3).

    Compatibility glue only: the (N,P,C)<->(C,N,P) transposes, the (N,P,1)
    broadcasts and the angular_flow slices below are each a full HBM pass
    that rivals the kernel itself.  In-model, keep the component-major
    (C, N, P) layout end to end, carry base_t / dt as (N, 1), read rot/anchor
    from the original angular_flow array, and call
    advect_points_component_major directly.
    """
    N, P, _ = points.shape

    # Per-ray scalars: computed in plain JAX (O(N)), kept out of the kernel.
    t = rays[..., -1].astype(jnp.float32)                               # (N,)
    # TODO(synk): exact get_base_time() helper is not part of the given module
    # source; eval-mode nearest-keyframe snap (flow_scale=0, no jitter) is used.
    base_t = jnp.floor(t * float(flow_keyframes) + 0.5) / float(flow_keyframes)
    dt = t - base_t                                                     # (N,)

    pts_cm = jnp.transpose(points, (2, 0, 1))
    af_cm = jnp.transpose(angular_flow, (2, 0, 1))
    sf_cm = jnp.transpose(spatial_flow, (2, 0, 1))

    pts_new_cm, off_cm = advect_points_component_major(
        dt[:, None], pts_cm, af_cm, sf_cm, tile_n=tile_n)

    return {
        "points": jnp.transpose(pts_new_cm, (1, 2, 0)),                 # (N, P, 3)
        "offset": jnp.transpose(off_cm, (1, 2, 0)),                     # (N, P, 3)
        # matches the module's .repeat(); prefer the (N, 1) form downstream.
        "base_times": jnp.broadcast_to(base_t[:, None, None], (N, P, 1)),
        "time_offset": jnp.broadcast_to(dt[:, None, None], (N, P, 1)),
        # identity activations -> pass-through (these slices materialize copies;
        # production code should keep reading from angular_flow directly).
        "angular_flow_rot": angular_flow[..., :3],
        "angular_flow_anchor": angular_flow[..., 3:6],
        "spatial_flow": spatial_flow,
    }


# ----------------------------- pure-JAX reference -----------------------------
def _axis_angle_to_matrix_ref(aa):
    """pytorch3d-style axis_angle_to_matrix via quaternions."""
    theta = jnp.linalg.norm(aa, axis=-1, keepdims=True)
    half = theta * 0.5
    small = theta < 1e-4
    sin_half_over_theta = jnp.where(
        small, 0.5 - theta * theta / 48.0,
        jnp.sin(half) / jnp.where(small, 1.0, theta))
    w = jnp.cos(half)[..., 0]
    xyz = aa * sin_half_over_theta
    x, y, z = xyz[..., 0], xyz[..., 1], xyz[..., 2]
    R = jnp.stack([
        1 - 2 * (y * y + z * z), 2 * (x * y - z * w), 2 * (x * z + y * w),
        2 * (x * y + z * w), 1 - 2 * (x * x + z * z), 2 * (y * z - x * w),
        2 * (x * z - y * w), 2 * (y * z + x * w), 1 - 2 * (x * x + y * y),
    ], axis=-1)
    return R.reshape(aa.shape[:-1] + (3, 3))


def reference(rays, points, angular_flow, spatial_flow, flow_keyframes):
    t = rays[..., -1:]                                            # (N,1)
    base_t = jnp.floor(t * flow_keyframes + 0.5) / flow_keyframes
    time_offset = (t - base_t)[..., None, :]                      # (N,1,1)
    rot_aa = angular_flow[..., :3] * time_offset
    anchor = angular_flow[..., 3:6]
    R = _axis_angle_to_matrix_ref(rot_aa)                         # (N,P,3,3)
    q = points - anchor
    q = jnp.einsum("npij,npj->npi", R, q)
    pts = q + anchor + spatial_flow * time_offset
    N, P, _ = points.shape
    base_times = jnp.broadcast_to(base_t[..., None, :], (N, P, 1))
    time_off = jnp.broadcast_to(time_offset, (N, P, 1))
    return pts, points - pts, base_times, time_off


if __name__ == "__main__":
    key = jax.random.PRNGKey(0)
    RC = 8                                  # ray channels, time in last channel
    # (256,128): divisor path; (200,128): exercises the N-padding path.
    for N, P in [(256, 128), (200, 128)]:
        k1, k2, k3, k4 = jax.random.split(jax.random.fold_in(key, N), 4)
        rays = jax.random.uniform(k1, (N, RC), jnp.float32)
        points = jax.random.normal(k2, (N, P, 3), jnp.float32)
        angular_flow = jax.random.normal(k3, (N, P, 6), jnp.float32) * 0.1
        spatial_flow = jax.random.normal(k4, (N, P, 3), jnp.float32) * 0.1

        out = advect_points_embedding(rays, points, angular_flow, spatial_flow)
        jax.block_until_ready(out)

        ref_pts, ref_off, ref_bt, ref_dt = reference(
            rays, points, angular_flow, spatial_flow, float(FLOW_KEYFRAMES))
        np.testing.assert_allclose(np.asarray(out["points"]), np.asarray(ref_pts),
                                   rtol=1e-5, atol=1e-5)
        np.testing.assert_allclose(np.asarray(out["offset"]), np.asarray(ref_off),
                                   rtol=1e-5, atol=1e-5)
        np.testing.assert_allclose(np.asarray(out["base_times"]), np.asarray(ref_bt),
                                   rtol=1e-6, atol=1e-6)
        np.testing.assert_allclose(np.asarray(out["time_offset"]), np.asarray(ref_dt),
                                   rtol=1e-6, atol=1e-6)
    print("KERNEL_OK")
</pallas_src>

<mosaic_0001>
module attributes {stable_mosaic.version = 11 : i64} {
  func.func @_advect_kernel(%arg0: i32, %arg1: memref<32x1xf32, #tpu.memory_space<vmem>>, %arg2: memref<3x32x128xf32, #tpu.memory_space<vmem>>, %arg3: memref<6x32x128xf32, #tpu.memory_space<vmem>>, %arg4: memref<3x32x128xf32, #tpu.memory_space<vmem>>, %arg5: memref<3x32x128xf32, #tpu.memory_space<vmem>>, %arg6: memref<3x32x128xf32, #tpu.memory_space<vmem>>) attributes {dimension_semantics = [#tpu.dimension_semantics<parallel>], iteration_bounds = array<i64: 8>, scalar_prefetch = 0 : i64, scratch_operands = 0 : i64, tpu.core_type = #tpu.core_type<tc>, window_params = [{transform_indices = @transform_0, window_bounds = array<i64: 32, 1>}, {transform_indices = @transform_1, window_bounds = array<i64: 3, 32, 128>}, {transform_indices = @transform_2, window_bounds = array<i64: 6, 32, 128>}, {transform_indices = @transform_3, window_bounds = array<i64: 3, 32, 128>}, {transform_indices = @transform_4, window_bounds = array<i64: 3, 32, 128>}, {transform_indices = @transform_5, window_bounds = array<i64: 3, 32, 128>}]} {
    %c0_i32 = arith.constant 0 : i32
    %c2_i32 = arith.constant 2 : i32
    %0 = arith.addi %c0_i32, %c2_i32 : i32
    %c1_i32 = arith.constant 1 : i32
    scf.for %arg7 = %c0_i32 to %0 step %c1_i32  : i32 {
      %c1_i32_1 = arith.constant 1 : i32
      %1 = arith.muli %arg7, %c1_i32_1 : i32
      %c0_i32_2 = arith.constant 0 : i32
      %2 = arith.addi %c0_i32_2, %1 : i32
      %c16_i32 = arith.constant 16 : i32
      %3 = arith.muli %2, %c16_i32 : i32
      %4 = tpu.assume_multiple %3, 16 : i32
      %5 = arith.index_cast %4 : i32 to index
      %c0 = arith.constant 0 : index
      %6 = vector.load %arg1[%5, %c0] : memref<32x1xf32, #tpu.memory_space<vmem>>, vector<16x1xf32>
      %7 = vector.shape_cast %6 : vector<16x1xf32> to vector<16x1xf32>
      %8 = vector.broadcast %7 : vector<16x1xf32> to vector<16x128xf32>
      %c0_3 = arith.constant 0 : index
      %9 = arith.index_cast %4 : i32 to index
      %c0_4 = arith.constant 0 : index
      %10 = vector.load %arg2[%c0_3, %9, %c0_4] : memref<3x32x128xf32, #tpu.memory_space<vmem>>, vector<1x16x128xf32>
      %11 = vector.shape_cast %10 : vector<1x16x128xf32> to vector<16x128xf32>
      %c1 = arith.constant 1 : index
      %12 = arith.index_cast %4 : i32 to index
      %c0_5 = arith.constant 0 : index
      %13 = vector.load %arg2[%c1, %12, %c0_5] : memref<3x32x128xf32, #tpu.memory_space<vmem>>, vector<1x16x128xf32>
      %14 = vector.shape_cast %13 : vector<1x16x128xf32> to vector<16x128xf32>
      %c2 = arith.constant 2 : index
      %15 = arith.index_cast %4 : i32 to index
      %c0_6 = arith.constant 0 : index
      %16 = vector.load %arg2[%c2, %15, %c0_6] : memref<3x32x128xf32, #tpu.memory_space<vmem>>, vector<1x16x128xf32>
      %17 = vector.shape_cast %16 : vector<1x16x128xf32> to vector<16x128xf32>
      %c3 = arith.constant 3 : index
      %18 = arith.index_cast %4 : i32 to index
      %c0_7 = arith.constant 0 : index
      %19 = vector.load %arg3[%c3, %18, %c0_7] : memref<6x32x128xf32, #tpu.memory_space<vmem>>, vector<1x16x128xf32>
      %20 = vector.shape_cast %19 : vector<1x16x128xf32> to vector<16x128xf32>
      %c4 = arith.constant 4 : index
      %21 = arith.index_cast %4 : i32 to index
      %c0_8 = arith.constant 0 : index
      %22 = vector.load %arg3[%c4, %21, %c0_8] : memref<6x32x128xf32, #tpu.memory_space<vmem>>, vector<1x16x128xf32>
      %23 = vector.shape_cast %22 : vector<1x16x128xf32> to vector<16x128xf32>
      %c5 = arith.constant 5 : index
      %24 = arith.index_cast %4 : i32 to index
      %c0_9 = arith.constant 0 : index
      %25 = vector.load %arg3[%c5, %24, %c0_9] : memref<6x32x128xf32, #tpu.memory_space<vmem>>, vector<1x16x128xf32>
      %26 = vector.shape_cast %25 : vector<1x16x128xf32> to vector<16x128xf32>
      %c0_10 = arith.constant 0 : index
      %27 = arith.index_cast %4 : i32 to index
      %c0_11 = arith.constant 0 : index
      %28 = vector.load %arg3[%c0_10, %27, %c0_11] : memref<6x32x128xf32, #tpu.memory_space<vmem>>, vector<1x16x128xf32>
      %29 = vector.shape_cast %28 : vector<1x16x128xf32> to vector<16x128xf32>
      %30 = arith.mulf %29, %8 : vector<16x128xf32>
      %c1_12 = arith.constant 1 : index
      %31 = arith.index_cast %4 : i32 to index
      %c0_13 = arith.constant 0 : index
      %32 = vector.load %arg3[%c1_12, %31, %c0_13] : memref<6x32x128xf32, #tpu.memory_space<vmem>>, vector<1x16x128xf32>
      %33 = vector.shape_cast %32 : vector<1x16x128xf32> to vector<16x128xf32>
      %34 = arith.mulf %33, %8 : vector<16x128xf32>
      %c2_14 = arith.constant 2 : index
      %35 = arith.index_cast %4 : i32 to index
      %c0_15 = arith.constant 0 : index
      %36 = vector.load %arg3[%c2_14, %35, %c0_15] : memref<6x32x128xf32, #tpu.memory_space<vmem>>, vector<1x16x128xf32>
      %37 = vector.shape_cast %36 : vector<1x16x128xf32> to vector<16x128xf32>
      %38 = arith.mulf %37, %8 : vector<16x128xf32>
      %39 = arith.mulf %30, %30 : vector<16x128xf32>
      %40 = arith.mulf %34, %34 : vector<16x128xf32>
      %41 = arith.addf %39, %40 : vector<16x128xf32>
      %42 = arith.mulf %38, %38 : vector<16x128xf32>
      %43 = arith.addf %41, %42 : vector<16x128xf32>
      %cst = arith.constant 9.99999993E-9 : f32
      %44 = vector.broadcast %cst : f32 to vector<16x128xf32>
      %45 = arith.cmpf olt, %43, %44 : vector<16x128xf32>
      %cst_16 = arith.constant 1.000000e+00 : f32
      %46 = vector.broadcast %cst_16 : f32 to vector<16x128xf32>
      %47 = arith.select %45, %46, %43 : vector<16x128xi1>, vector<16x128xf32>
      %48 = math.rsqrt %47 : vector<16x128xf32>
      %49 = arith.mulf %47, %48 : vector<16x128xf32>
      %cst_17 = arith.constant 0.166666672 : f32
      %50 = vector.broadcast %cst_17 : f32 to vector<16x128xf32>
      %51 = arith.mulf %43, %50 : vector<16x128xf32>
      %cst_18 = arith.constant 1.000000e+00 : f32
      %52 = vector.broadcast %cst_18 : f32 to vector<16x128xf32>
      %53 = arith.subf %52, %51 : vector<16x128xf32>
      %54 = math.sin %49 : vector<16x128xf32>
      %55 = arith.mulf %54, %48 : vector<16x128xf32>
      %56 = arith.select %45, %53, %55 : vector<16x128xi1>, vector<16x128xf32>
      %cst_19 = arith.constant 0.0416666679 : f32
      %57 = vector.broadcast %cst_19 : f32 to vector<16x128xf32>
      %58 = arith.mulf %43, %57 : vector<16x128xf32>
      %cst_20 = arith.constant 5.000000e-01 : f32
      %59 = vector.broadcast %cst_20 : f32 to vector<16x128xf32>
      %60 = arith.subf %59, %58 : vector<16x128xf32>
      %61 = math.cos %49 : vector<16x128xf32>
      %cst_21 = arith.constant 1.000000e+00 : f32
      %62 = vector.broadcast %cst_21 : f32 to vector<16x128xf32>
      %63 = arith.subf %62, %61 : vector<16x128xf32>
      %64 = arith.mulf %48, %48 : vector<16x128xf32>
      %65 = arith.mulf %63, %64 : vector<16x128xf32>
      %66 = arith.select %45, %60, %65 : vector<16x128xi1>, vector<16x128xf32>
      %67 = arith.subf %11, %20 : vector<16x128xf32>
      %68 = arith.subf %14, %23 : vector<16x128xf32>
      %69 = arith.subf %17, %26 : vector<16x128xf32>
      %70 = arith.mulf %34, %69 : vector<16x128xf32>
      %71 = arith.mulf %38, %68 : vector<16x128xf32>
      %72 = arith.subf %70, %71 : vector<16x128xf32>
      %73 = arith.mulf %38, %67 : vector<16x128xf32>
      %74 = arith.mulf %30, %69 : vector<16x128xf32>
      %75 = arith.subf %73, %74 : vector<16x128xf32>
      %76 = arith.mulf %30, %68 : vector<16x128xf32>
      %77 = arith.mulf %34, %67 : vector<16x128xf32>
      %78 = arith.subf %76, %77 : vector<16x128xf32>
      %79 = arith.mulf %34, %78 : vector<16x128xf32>
      %80 = arith.mulf %38, %75 : vector<16x128xf32>
      %81 = arith.subf %79, %80 : vector<16x128xf32>
      %82 = arith.mulf %38, %72 : vector<16x128xf32>
      %83 = arith.mulf %30, %78 : vector<16x128xf32>
      %84 = arith.subf %82, %83 : vector<16x128xf32>
      %85 = arith.mulf %30, %75 : vector<16x128xf32>
      %86 = arith.mulf %34, %72 : vector<16x128xf32>
      %87 = arith.subf %85, %86 : vector<16x128xf32>
      %88 = arith.mulf %56, %72 : vector<16x128xf32>
      %89 = arith.mulf %66, %81 : vector<16x128xf32>
      %90 = arith.addf %88, %89 : vector<16x128xf32>
      %c0_22 = arith.constant 0 : index
      %91 = arith.index_cast %4 : i32 to index
      %c0_23 = arith.constant 0 : index
      %92 = vector.load %arg4[%c0_22, %91, %c0_23] : memref<3x32x128xf32, #tpu.memory_space<vmem>>, vector<1x16x128xf32>
      %93 = vector.shape_cast %92 : vector<1x16x128xf32> to vector<16x128xf32>
      %94 = arith.mulf %93, %8 : vector<16x128xf32>
      %95 = arith.addf %90, %94 : vector<16x128xf32>
      %96 = arith.mulf %56, %75 : vector<16x128xf32>
      %97 = arith.mulf %66, %84 : vector<16x128xf32>
      %98 = arith.addf %96, %97 : vector<16x128xf32>
      %c1_24 = arith.constant 1 : index
      %99 = arith.index_cast %4 : i32 to index
      %c0_25 = arith.constant 0 : index
      %100 = vector.load %arg4[%c1_24, %99, %c0_25] : memref<3x32x128xf32, #tpu.memory_space<vmem>>, vector<1x16x128xf32>
      %101 = vector.shape_cast %100 : vector<1x16x128xf32> to vector<16x128xf32>
      %102 = arith.mulf %101, %8 : vector<16x128xf32>
      %103 = arith.addf %98, %102 : vector<16x128xf32>
      %104 = arith.mulf %56, %78 : vector<16x128xf32>
      %105 = arith.mulf %66, %87 : vector<16x128xf32>
      %106 = arith.addf %104, %105 : vector<16x128xf32>
      %c2_26 = arith.constant 2 : index
      %107 = arith.index_cast %4 : i32 to index
      %c0_27 = arith.constant 0 : index
      %108 = vector.load %arg4[%c2_26, %107, %c0_27] : memref<3x32x128xf32, #tpu.memory_space<vmem>>, vector<1x16x128xf32>
      %109 = vector.shape_cast %108 : vector<1x16x128xf32> to vector<16x128xf32>
      %110 = arith.mulf %109, %8 : vector<16x128xf32>
      %111 = arith.addf %106, %110 : vector<16x128xf32>
      %112 = arith.addf %11, %95 : vector<16x128xf32>
      %c0_28 = arith.constant 0 : index
      %113 = arith.index_cast %4 : i32 to index
      %c0_29 = arith.constant 0 : index
      %114 = vector.load %arg5[%c0_28, %113, %c0_29] : memref<3x32x128xf32, #tpu.memory_space<vmem>>, vector<1x16x128xf32>
      %115 = vector.shape_cast %114 : vector<1x16x128xf32> to vector<16x128xf32>
      %116 = vector.shape_cast %112 : vector<16x128xf32> to vector<1x16x128xf32>
      tpu.vector_store %arg5[%c0_28, %113, %c0_29], %116 {strides = array<i32>} : memref<3x32x128xf32, #tpu.memory_space<vmem>>, vector<1x16x128xf32>,
      %117 = arith.addf %14, %103 : vector<16x128xf32>
      %c1_30 = arith.constant 1 : index
      %118 = arith.index_cast %4 : i32 to index
      %c0_31 = arith.constant 0 : index
      %119 = vector.load %arg5[%c1_30, %118, %c0_31] : memref<3x32x128xf32, #tpu.memory_space<vmem>>, vector<1x16x128xf32>
      %120 = vector.shape_cast %119 : vector<1x16x128xf32> to vector<16x128xf32>
      %121 = vector.shape_cast %117 : vector<16x128xf32> to vector<1x16x128xf32>
      tpu.vector_store %arg5[%c1_30, %118, %c0_31], %121 {strides = array<i32>} : memref<3x32x128xf32, #tpu.memory_space<vmem>>, vector<1x16x128xf32>,
      %122 = arith.addf %17, %111 : vector<16x128xf32>
      %c2_32 = arith.constant 2 : index
      %123 = arith.index_cast %4 : i32 to index
      %c0_33 = arith.constant 0 : index
      %124 = vector.load %arg5[%c2_32, %123, %c0_33] : memref<3x32x128xf32, #tpu.memory_space<vmem>>, vector<1x16x128xf32>
      %125 = vector.shape_cast %124 : vector<1x16x128xf32> to vector<16x128xf32>
      %126 = vector.shape_cast %122 : vector<16x128xf32> to vector<1x16x128xf32>
      tpu.vector_store %arg5[%c2_32, %123, %c0_33], %126 {strides = array<i32>} : memref<3x32x128xf32, #tpu.memory_space<vmem>>, vector<1x16x128xf32>,
      %cst_34 = arith.constant 0.000000e+00 : f32
      %127 = vector.broadcast %cst_34 : f32 to vector<16x128xf32>
      %128 = arith.subf %127, %95 : vector<16x128xf32>
      %c0_35 = arith.constant 0 : index
      %129 = arith.index_cast %4 : i32 to index
      %c0_36 = arith.constant 0 : index
      %130 = vector.load %arg6[%c0_35, %129, %c0_36] : memref<3x32x128xf32, #tpu.memory_space<vmem>>, vector<1x16x128xf32>
      %131 = vector.shape_cast %130 : vector<1x16x128xf32> to vector<16x128xf32>
      %132 = vector.shape_cast %128 : vector<16x128xf32> to vector<1x16x128xf32>
      tpu.vector_store %arg6[%c0_35, %129, %c0_36], %132 {strides = array<i32>} : memref<3x32x128xf32, #tpu.memory_space<vmem>>, vector<1x16x128xf32>,
      %cst_37 = arith.constant 0.000000e+00 : f32
      %133 = vector.broadcast %cst_37 : f32 to vector<16x128xf32>
      %134 = arith.subf %133, %103 : vector<16x128xf32>
      %c1_38 = arith.constant 1 : index
      %135 = arith.index_cast %4 : i32 to index
      %c0_39 = arith.constant 0 : index
      %136 = vector.load %arg6[%c1_38, %135, %c0_39] : memref<3x32x128xf32, #tpu.memory_space<vmem>>, vector<1x16x128xf32>
      %137 = vector.shape_cast %136 : vector<1x16x128xf32> to vector<16x128xf32>
      %138 = vector.shape_cast %134 : vector<16x128xf32> to vector<1x16x128xf32>
      tpu.vector_store %arg6[%c1_38, %135, %c0_39], %138 {strides = array<i32>} : memref<3x32x128xf32, #tpu.memory_space<vmem>>, vector<1x16x128xf32>,
      %cst_40 = arith.constant 0.000000e+00 : f32
      %139 = vector.broadcast %cst_40 : f32 to vector<16x128xf32>
      %140 = arith.subf %139, %111 : vector<16x128xf32>
      %c2_41 = arith.constant 2 : index
      %141 = arith.index_cast %4 : i32 to index
      %c0_42 = arith.constant 0 : index
      %142 = vector.load %arg6[%c2_41, %141, %c0_42] : memref<3x32x128xf32, #tpu.memory_space<vmem>>, vector<1x16x128xf32>
      %143 = vector.shape_cast %142 : vector<1x16x128xf32> to vector<16x128xf32>
      %144 = vector.shape_cast %140 : vector<16x128xf32> to vector<1x16x128xf32>
      tpu.vector_store %arg6[%c2_41, %141, %c0_42], %144 {strides = array<i32>} : memref<3x32x128xf32, #tpu.memory_space<vmem>>, vector<1x16x128xf32>,
    }
    %c2_i32_0 = arith.constant 2 : i32
    return
  }
  func.func @transform_0(%arg0: i32) -> (i32, i32) {
    %c0_i32 = arith.constant 0 : i32
    %c0_i32_0 = arith.constant 0 : i32
    return %arg0, %c0_i32 : i32, i32
  }
  func.func @transform_1(%arg0: i32) -> (i32, i32, i32) {
    %c0_i32 = arith.constant 0 : i32
    %c0_i32_0 = arith.constant 0 : i32
    %c0_i32_1 = arith.constant 0 : i32
    return %c0_i32, %arg0, %c0_i32_0 : i32, i32, i32
  }
  func.func @transform_2(%arg0: i32) -> (i32, i32, i32) {
    %c0_i32 = arith.constant 0 : i32
    %c0_i32_0 = arith.constant 0 : i32
    %c0_i32_1 = arith.constant 0 : i32
    return %c0_i32, %arg0, %c0_i32_0 : i32, i32, i32
  }
  func.func @transform_3(%arg0: i32) -> (i32, i32, i32) {
    %c0_i32 = arith.constant 0 : i32
    %c0_i32_0 = arith.constant 0 : i32
    %c0_i32_1 = arith.constant 0 : i32
    return %c0_i32, %arg0, %c0_i32_0 : i32, i32, i32
  }
  func.func @transform_4(%arg0: i32) -> (i32, i32, i32) {
    %c0_i32 = arith.constant 0 : i32
    %c0_i32_0 = arith.constant 0 : i32
    %c0_i32_1 = arith.constant 0 : i32
    return %c0_i32, %arg0, %c0_i32_0 : i32, i32, i32
  }
  func.func @transform_5(%arg0: i32) -> (i32, i32, i32) {
    %c0_i32 = arith.constant 0 : i32
    %c0_i32_0 = arith.constant 0 : i32
    %c0_i32_1 = arith.constant 0 : i32
    return %c0_i32, %arg0, %c0_i32_0 : i32, i32, i32
  }
}

</mosaic_0001>

<llo_original>
// kernel: tpu_custom_call.1
$region0: #{tpu_custom_call.1}
  #allocation0 [shape = 'u32[]', space=smem, size = 0x4, offset = 0x4, fixed_abs, tag = 'smem constant byte address 0x4 - core index']
  #allocation1 [shape = 'u32[72,128]{1,0:T(1,128)}', space=vmem, size = 0x9000, scoped, tag = 'internal scratch']
  #allocation11 [shape = 's32[]', space=sflag, size = 0x4, offset = 0, fixed_abs, tag = 'sflag constant byte address 0x0 - dummy sync flag']
  #allocation13 [shape = 's32[]', space=sflag, size = 0x4, offset = 0, fixed_abs, tag = 'sflag constant byte address 0x0 - dummy sync flag']
  #allocation15 [shape = 's32[]', space=sflag, size = 0x4, offset = 0, fixed_abs, tag = 'sflag constant byte address 0x0 - dummy sync flag']
  #allocation17 [shape = 's32[]', space=sflag, size = 0x4, offset = 0, fixed_abs, tag = 'sflag constant byte address 0x0 - dummy sync flag']
  #allocation19 [shape = 's32[]', space=sflag, size = 0x4, offset = 0, fixed_abs, tag = 'sflag constant byte address 0x0 - dummy sync flag']
  %s0 = inlined_call_operand.vmem [shape: f32[256,1], index: 0, kind: input, shape index: {}]
  %s1 = inlined_call_operand.hbm [shape: f32[3,256,128], index: 1, kind: input, shape index: {}]
  %s2 = inlined_call_operand.hbm [shape: f32[6,256,128], index: 2, kind: input, shape index: {}]
  %s3 = inlined_call_operand.hbm [shape: f32[3,256,128], index: 3, kind: input, shape index: {}]
  %s4 = inlined_call_operand.hbm [shape: f32[3,256,128], index: 4, kind: output, shape index: {0}]
  %s5 = inlined_call_operand.hbm [shape: f32[3,256,128], index: 5, kind: output, shape index: {1}]
  %6 = xla_tuple %s4, %s5
  %s7 = sld [smem:[#allocation0]]
  $region76: #{tpu_custom_call.1} parent=0
    _
  %s9 = ssub.s32 1, %s7
  %s10 = scalar_select 0, %s9, %s7
  $region1: #{tpu_custom_call.1} parent=0
    #allocation2 [shape = 'u8[98304]{0}', space=vmem, size = 0x18000, scoped, tag = 'input window, operand 1']
    #allocation3 [shape = 's32[2]{0}', space=sflag, size = 0x8, scoped, tag = 'scoped memory for tpu_custom_call.1']
    #allocation4 [shape = 's32[2]{0}', space=sflag, size = 0x8, scoped, tag = 'scoped memory for tpu_custom_call.1']
    #allocation5 [shape = 'u8[196608]{0}', space=vmem, size = 0x30000, scoped, tag = 'input window, operand 2']
    #allocation6 [shape = 's32[2]{0}', space=sflag, size = 0x8, scoped, tag = 'scoped memory for tpu_custom_call.1']
    #allocation7 [shape = 'u8[98304]{0}', space=vmem, size = 0x18000, scoped, tag = 'input window, operand 3']
    #allocation8 [shape = 'u8[98304]{0}', space=vmem, size = 0x18000, scoped, tag = 'output window, operand 0']
    #allocation9 [shape = 'u8[98304]{0}', space=vmem, size = 0x18000, scoped, tag = 'output window, operand 1']
    #allocation10 [shape = 's32[2]{0}', space=sflag, size = 0x8, scoped, tag = 'scoped memory for tpu_custom_call.1']
    %11 = vsyncpa [#allocation3], 0
    %s12 = scalar_lea.sflag [#allocation3], 1
    %13 = vsyncpa %s12, 0
    %14 = vsyncpa [#allocation6], 0
    %s15 = scalar_lea.sflag [#allocation6], 1
    %16 = vsyncpa %s15, 0
    %17 = vsyncpa [#allocation4], 0
    %s18 = scalar_lea.sflag [#allocation4], 1
    %19 = vsyncpa %s18, 0
    %20 = vsyncpa [#allocation10], 0
    %s21 = scalar_lea.sflag [#allocation10], 1
    %22 = vsyncpa %s21, 0
    loop: start=0, step=1, limit=10
    $region2: #{tpu_custom_call.1} parent=1 // loop_pre_header
      _
    $region3: #{tpu_custom_call.1} parent=1 // loop_header
      %s24 = sphi 0, %s28
      %p25 = scmp.ge.s32.totalorder %s24, 10
      %s34 = sphi 0, %s36
      %s37 = sphi 0, %s34
      %s38 = sphi 0, %s37
      %s54 = sphi 0, %s38
      %s60 = sphi 0, %s62
      %s63 = sphi 0, %s60
      %s64 = sphi 0, %s63
      %s80 = sphi 0, %s64
      %s86 = sphi 0, %s88
      %s89 = sphi 0, %s86
      %s90 = sphi 0, %s89
      %s106 = sphi 0, %s90
      %s112 = sphi 0, %s114
      %s115 = sphi 0, %s112
      %s116 = sphi 0, %s115
      %s132 = sphi 0, %s116
      %s138 = sphi 0, %s140
      %s141 = sphi 0, %s138
      %s142 = sphi 0, %s141
      %s158 = sphi 0, %s142
      %s164 = sphi 0, %s166
      %s167 = sphi 0, %s164
      %s168 = sphi 0, %s167
      %s184 = sphi 0, %s168
    $region4: #{tpu_custom_call.1} parent=1 // loop_header_branch
      %27 = sbr.rel (%p25) target = $region8
    $region5: #{tpu_custom_call.1} parent=1 // loop_body
      %s29 = ssub.s32 %s24, 1
      %s30 = ssub.s32 %s24, 2
      %s31 = sadd.s32 %s24, 1
      %s32 = ssub.s32 %s24, %s31
      %p33 = scmp.eq.s32.totalorder %s32, 0
      %s35 = sadd.s32 %s34, 1
      %s36 = scalar_select %p33, %s34, %s35
      %p39 = pneg %p33
      %p40 = scmp.eq.s32.totalorder %s24, 7
      %p41 = por %p39, %p40
      %p42 = scmp.ne.s32.totalorder %s34, %s37
      %p43 = scmp.eq.s32.totalorder %s24, 0
      %p44 = por %p42, %p43
      %p45 = scmp.ne.s32.totalorder %s34, %s37
      %p46 = scmp.eq.s32.totalorder %s29, 7
      %p47 = por %p45, %p46
      %p48 = scmp.ne.s32.totalorder %s37, %s38
      %p49 = scmp.eq.s32.totalorder %s29, 0
      %p50 = por %p48, %p49
      %p51 = scmp.ne.s32.totalorder %s37, %s38
      %p52 = scmp.eq.s32.totalorder %s30, 7
      %p53 = por %p51, %p52
      %p55 = scmp.ne.s32.totalorder %s38, %s54
      %p56 = scmp.eq.s32.totalorder %s30, 0
      %p57 = por %p55, %p56
      %s58 = ssub.s32 %s24, %s31
      %p59 = scmp.eq.s32.totalorder %s58, 0
      %s61 = sadd.s32 %s60, 1
      %s62 = scalar_select %p59, %s60, %s61
      %p65 = pneg %p59
      %p66 = scmp.eq.s32.totalorder %s24, 7
      %p67 = por %p65, %p66
      %p68 = scmp.ne.s32.totalorder %s60, %s63
      %p69 = scmp.eq.s32.totalorder %s24, 0
      %p70 = por %p68, %p69
      %p71 = scmp.ne.s32.totalorder %s60, %s63
      %p72 = scmp.eq.s32.totalorder %s29, 7
      %p73 = por %p71, %p72
      %p74 = scmp.ne.s32.totalorder %s63, %s64
      %p75 = scmp.eq.s32.totalorder %s29, 0
      %p76 = por %p74, %p75
      %p77 = scmp.ne.s32.totalorder %s63, %s64
      %p78 = scmp.eq.s32.totalorder %s30, 7
      %p79 = por %p77, %p78
      %p81 = scmp.ne.s32.totalorder %s64, %s80
      %p82 = scmp.eq.s32.totalorder %s30, 0
      %p83 = por %p81, %p82
      %s84 = ssub.s32 %s24, %s31
      %p85 = scmp.eq.s32.totalorder %s84, 0
      %s87 = sadd.s32 %s86, 1
      %s88 = scalar_select %p85, %s86, %s87
      %p91 = pneg %p85
      %p92 = scmp.eq.s32.totalorder %s24, 7
      %p93 = por %p91, %p92
      %p94 = scmp.ne.s32.totalorder %s86, %s89
      %p95 = scmp.eq.s32.totalorder %s24, 0
      %p96 = por %p94, %p95
      %p97 = scmp.ne.s32.totalorder %s86, %s89
      %p98 = scmp.eq.s32.totalorder %s29, 7
      %p99 = por %p97, %p98
      %p100 = scmp.ne.s32.totalorder %s89, %s90
      %p101 = scmp.eq.s32.totalorder %s29, 0
      %p102 = por %p100, %p101
      %p103 = scmp.ne.s32.totalorder %s89, %s90
      %p104 = scmp.eq.s32.totalorder %s30, 7
      %p105 = por %p103, %p104
      %p107 = scmp.ne.s32.totalorder %s90, %s106
      %p108 = scmp.eq.s32.totalorder %s30, 0
      %p109 = por %p107, %p108
      %s110 = ssub.s32 %s24, %s31
      %p111 = scmp.eq.s32.totalorder %s110, 0
      %s113 = sadd.s32 %s112, 1
      %s114 = scalar_select %p111, %s112, %s113
      %p117 = pneg %p111
      %p118 = scmp.eq.s32.totalorder %s24, 7
      %p119 = por %p117, %p118
      %p120 = scmp.ne.s32.totalorder %s112, %s115
      %p121 = scmp.eq.s32.totalorder %s24, 0
      %p122 = por %p120, %p121
      %p123 = scmp.ne.s32.totalorder %s112, %s115
      %p124 = scmp.eq.s32.totalorder %s29, 7
      %p125 = por %p123, %p124
      %p126 = scmp.ne.s32.totalorder %s115, %s116
      %p127 = scmp.eq.s32.totalorder %s29, 0
      %p128 = por %p126, %p127
      %p129 = scmp.ne.s32.totalorder %s115, %s116
      %p130 = scmp.eq.s32.totalorder %s30, 7
      %p131 = por %p129, %p130
      %p133 = scmp.ne.s32.totalorder %s116, %s132
      %p134 = scmp.eq.s32.totalorder %s30, 0
      %p135 = por %p133, %p134
      %s136 = ssub.s32 %s24, %s31
      %p137 = scmp.eq.s32.totalorder %s136, 0
      %s139 = sadd.s32 %s138, 1
      %s140 = scalar_select %p137, %s138, %s139
      %p143 = pneg %p137
      %p144 = scmp.eq.s32.totalorder %s24, 7
      %p145 = por %p143, %p144
      %p146 = scmp.ne.s32.totalorder %s138, %s141
      %p147 = scmp.eq.s32.totalorder %s24, 0
      %p148 = por %p146, %p147
      %p149 = scmp.ne.s32.totalorder %s138, %s141
      %p150 = scmp.eq.s32.totalorder %s29, 7
      %p151 = por %p149, %p150
      %p152 = scmp.ne.s32.totalorder %s141, %s142
      %p153 = scmp.eq.s32.totalorder %s29, 0
      %p154 = por %p152, %p153
      %p155 = scmp.ne.s32.totalorder %s141, %s142
      %p156 = scmp.eq.s32.totalorder %s30, 7
      %p157 = por %p155, %p156
      %p159 = scmp.ne.s32.totalorder %s142, %s158
      %p160 = scmp.eq.s32.totalorder %s30, 0
      %p161 = por %p159, %p160
      %s162 = ssub.s32 %s24, %s31
      %p163 = scmp.eq.s32.totalorder %s162, 0
      %s165 = sadd.s32 %s164, 1
      %s166 = scalar_select %p163, %s164, %s165
      %p169 = pneg %p163
      %p170 = scmp.eq.s32.totalorder %s24, 7
      %p171 = por %p169, %p170
      %p172 = scmp.ne.s32.totalorder %s164, %s167
      %p173 = scmp.eq.s32.totalorder %s24, 0
      %p174 = por %p172, %p173
      %p175 = scmp.ne.s32.totalorder %s164, %s167
      %p176 = scmp.eq.s32.totalorder %s29, 7
      %p177 = por %p175, %p176
      %p178 = scmp.ne.s32.totalorder %s167, %s168
      %p179 = scmp.eq.s32.totalorder %s29, 0
      %p180 = por %p178, %p179
      %p181 = scmp.ne.s32.totalorder %s167, %s168
      %p182 = scmp.eq.s32.totalorder %s30, 7
      %p183 = por %p181, %p182
      %p185 = scmp.ne.s32.totalorder %s168, %s184
      %p186 = scmp.eq.s32.totalorder %s30, 0
      %p187 = por %p185, %p186
      %p188 = scmp.le.s32.totalorder 1, %s24
      %p189 = scmp.lt.s32.totalorder %s24, 9
      %p190 = pnand %p188, %p189
      %p191 = pneg %p190
      // Predicated region
      $region9: #{tpu_custom_call.1} parent=5 // pred_check
        _
      $region10: #{tpu_custom_call.1} parent=5 // pred_check_branch
        %193 = sbr.rel (%p190) target = $region12
      $region11: #{tpu_custom_call.1} parent=5 // pred_region
        %s194 = ssub.s32 %s24, 1
      $region12: #{tpu_custom_call.1} parent=5 // pred_fallthru
        _
      %p195 = scmp.lt.s32.totalorder %s24, 8
      // Predicated region
      $region13: #{tpu_custom_call.1} parent=5 // pred_check
        %p196 = pneg %p195
      $region14: #{tpu_custom_call.1} parent=5 // pred_check_branch
        %198 = sbr.rel (%p196) target = $region16
      $region15: #{tpu_custom_call.1} parent=5 // pred_region
        // Predicated region
        $region17: #{tpu_custom_call.1} parent=15 // pred_check
          %p199 = pneg %p44
        $region18: #{tpu_custom_call.1} parent=15 // pred_check_branch
          %201 = sbr.rel (%p199) target = $region20
        $region19: #{tpu_custom_call.1} parent=15 // pred_region
          %s202 = smul.u32 4, %s24
          %p203 = scmp.lt.s32.totalorder %s202, 31
          %s204 = scalar_select %p203, %s202, 31
          %s205 = smul.addr %s204, 8
          %s206 = scalar_lea.vmem %s0, %s205
          %s207 = smul.u32 4, %s24
        $region20: #{tpu_custom_call.1} parent=15 // pred_fallthru
          _
        // Predicated region
        $region21: #{tpu_custom_call.1} parent=15 // pred_check
          %p208 = pneg %p70
        $region22: #{tpu_custom_call.1} parent=15 // pred_check_branch
          %210 = sbr.rel (%p208) target = $region24
        $region23: #{tpu_custom_call.1} parent=15 // pred_region
          #allocation12 [shape = 'u32[6]{0}', space=smem, size = 0x18, scoped, tag = 'DMA stride descriptor']
          %s211 = sand.u32 %s60, 1
          %s212 = scalar_lea.sflag [#allocation3], %s211
          %s213 = sand.u32 %s60, 1
          %s214 = smul.addr %s213, 96
          %s215 = scalar_lea.vmem [#allocation2], %s214
          %s216 = smul.u32 4, %s24
          %218 = vsyncadd %s212, 0
          %s219 = smul.addr %s216, 8
          %s220 = scalar_lea.hbm %s1, %s219
          %s222 = sshll.u32 1, 14
          %s223 = sxor.u32 4294967295, %s222
          %s225 = sld [smem:[#allocation0]]
          %s226 = sadd.s32 2, %s225
          %s228 = sshll.u32 7, 26
          %s229 = sxor.u32 4294967295, %s228
          %s230 = sand.u32 0, %s229
          %s231 = sshll.u32 %s226, 26
          %s232 = sor.u32 %s230, %s231
          %s233 = sshll.u32 %s220, 4
          %s234 = int_to_ptr.hbm [resolvable:$true] %s233
          %s235 = sshll.u32 %s215, 4
          %s236 = int_to_ptr.vmem [resolvable:$true] %s235
          %242 = sst [smem:[#allocation12]] 4096
          %s243 = scalar_lea.smem [#allocation12], 1
          %244 = sst [smem:[%s243]] 512
          %s245 = scalar_lea.smem [#allocation12], 2
          %246 = sst [smem:[%s245]] 4
          %s247 = scalar_lea.smem [#allocation12], 3
          %248 = sst [smem:[%s247]] 128
          %s249 = scalar_lea.smem [#allocation12], 4
          %250 = sst [smem:[%s249]] 128
          %s251 = scalar_lea.smem [#allocation12], 5
          %252 = sst [smem:[%s251]] 8
          %254 = dma.general %s234, 1536, %s236, %s212, [#allocation11], [#allocation12], %s232, 0
        $region24: #{tpu_custom_call.1} parent=15 // pred_fallthru
          _
        // Predicated region
        $region25: #{tpu_custom_call.1} parent=15 // pred_check
          %p255 = pneg %p96
        $region26: #{tpu_custom_call.1} parent=15 // pred_check_branch
          %257 = sbr.rel (%p255) target = $region28
        $region27: #{tpu_custom_call.1} parent=15 // pred_region
          #allocation14 [shape = 'u32[6]{0}', space=smem, size = 0x18, scoped, tag = 'DMA stride descriptor']
          %s258 = sand.u32 %s24, 1
          %s259 = scalar_lea.sflag [#allocation6], %s258
          %s260 = sand.u32 %s86, 1
          %s261 = smul.addr %s260, 192
          %s262 = scalar_lea.vmem [#allocation5], %s261
          %s263 = smul.u32 4, %s24
          %265 = vsyncadd %s259, 0
          %s266 = smul.addr %s263, 8
          %s267 = scalar_lea.hbm %s2, %s266
          %s269 = sshll.u32 1, 14
          %s270 = sxor.u32 4294967295, %s269
          %s272 = sld [smem:[#allocation0]]
          %s273 = sadd.s32 2, %s272
          %s275 = sshll.u32 7, 26
          %s276 = sxor.u32 4294967295, %s275
          %s277 = sand.u32 0, %s276
          %s278 = sshll.u32 %s273, 26
          %s279 = sor.u32 %s277, %s278
          %s280 = sshll.u32 %s267, 4
          %s281 = int_to_ptr.hbm [resolvable:$true] %s280
          %s282 = sshll.u32 %s262, 4
          %s283 = int_to_ptr.vmem [resolvable:$true] %s282
          %289 = sst [smem:[#allocation14]] 4096
          %s290 = scalar_lea.smem [#allocation14], 1
          %291 = sst [smem:[%s290]] 512
          %s292 = scalar_lea.smem [#allocation14], 2
          %293 = sst [smem:[%s292]] 4
          %s294 = scalar_lea.smem [#allocation14], 3
          %295 = sst [smem:[%s294]] 128
          %s296 = scalar_lea.smem [#allocation14], 4
          %297 = sst [smem:[%s296]] 128
          %s298 = scalar_lea.smem [#allocation14], 5
          %299 = sst [smem:[%s298]] 8
          %301 = dma.general %s281, 3072, %s283, %s259, [#allocation13], [#allocation14], %s279, 0
        $region28: #{tpu_custom_call.1} parent=15 // pred_fallthru
          _
        // Predicated region
        $region29: #{tpu_custom_call.1} parent=15 // pred_check
          %p302 = pneg %p122
        $region30: #{tpu_custom_call.1} parent=15 // pred_check_branch
          %304 = sbr.rel (%p302) target = $region32
        $region31: #{tpu_custom_call.1} parent=15 // pred_region
          #allocation16 [shape = 'u32[6]{0}', space=smem, size = 0x18, scoped, tag = 'DMA stride descriptor']
          %s305 = sand.u32 %s24, 1
          %s306 = scalar_lea.sflag [#allocation6], %s305
          %s307 = sand.u32 %s112, 1
          %s308 = smul.addr %s307, 96
          %s309 = scalar_lea.vmem [#allocation7], %s308
          %s310 = smul.u32 4, %s24
          %312 = vsyncadd %s306, 0
          %s313 = smul.addr %s310, 8
          %s314 = scalar_lea.hbm %s3, %s313
          %s316 = sshll.u32 1, 14
          %s317 = sxor.u32 4294967295, %s316
          %s319 = sld [smem:[#allocation0]]
          %s320 = sadd.s32 2, %s319
          %s322 = sshll.u32 7, 26
          %s323 = sxor.u32 4294967295, %s322
          %s324 = sand.u32 0, %s323
          %s325 = sshll.u32 %s320, 26
          %s326 = sor.u32 %s324, %s325
          %s327 = sshll.u32 %s314, 4
          %s328 = int_to_ptr.hbm [resolvable:$true] %s327
          %s329 = sshll.u32 %s309, 4
          %s330 = int_to_ptr.vmem [resolvable:$true] %s329
          %336 = sst [smem:[#allocation16]] 4096
          %s337 = scalar_lea.smem [#allocation16], 1
          %338 = sst [smem:[%s337]] 512
          %s339 = scalar_lea.smem [#allocation16], 2
          %340 = sst [smem:[%s339]] 4
          %s341 = scalar_lea.smem [#allocation16], 3
          %342 = sst [smem:[%s341]] 128
          %s343 = scalar_lea.smem [#allocation16], 4
          %344 = sst [smem:[%s343]] 128
          %s345 = scalar_lea.smem [#allocation16], 5
          %346 = sst [smem:[%s345]] 8
          %348 = dma.general %s328, 1536, %s330, %s306, [#allocation15], [#allocation16], %s326, 0
        $region32: #{tpu_custom_call.1} parent=15 // pred_fallthru
          _
      $region16: #{tpu_custom_call.1} parent=5 // pred_fallthru
        _
      %p349 = scmp.le.s32.totalorder 1, %s24
      %p350 = scmp.lt.s32.totalorder %s24, 9
      %p351 = pnand %p349, %p350
      %p352 = pneg %p351
      // Predicated region
      $region33: #{tpu_custom_call.1} parent=5 // pred_check
        _
      $region34: #{tpu_custom_call.1} parent=5 // pred_check_branch
        %354 = sbr.rel (%p351) target = $region36
      $region35: #{tpu_custom_call.1} parent=5 // pred_region
        %s355 = ssub.s32 %s24, 1
        %s356 = sand.u32 %s63, 1
        %s357 = scalar_lea.sflag [#allocation3], %s356
        %s358 = sand.u32 %s63, 1
        %s359 = smul.addr %s358, 96
        %s360 = scalar_lea.vmem [#allocation2], %s359
        // Predicated region
        $region37: #{tpu_custom_call.1} parent=35 // pred_check
          %p361 = pneg %p76
        $region38: #{tpu_custom_call.1} parent=35 // pred_check_branch
          %363 = sbr.rel (%p361) target = $region40
        $region39: #{tpu_custom_call.1} parent=35 // pred_region
          %365 = dma.done %s357, 1536
        $region40: #{tpu_custom_call.1} parent=35 // pred_fallthru
          _
        %s366 = sand.u32 %s29, 1
        %s367 = scalar_lea.sflag [#allocation6], %s366
        %s368 = sand.u32 %s89, 1
        %s369 = smul.addr %s368, 192
        %s370 = scalar_lea.vmem [#allocation5], %s369
        // Predicated region
        $region41: #{tpu_custom_call.1} parent=35 // pred_check
          %p371 = pneg %p102
        $region42: #{tpu_custom_call.1} parent=35 // pred_check_branch
          %373 = sbr.rel (%p371) target = $region44
        $region43: #{tpu_custom_call.1} parent=35 // pred_region
          %375 = dma.done %s367, 3072
        $region44: #{tpu_custom_call.1} parent=35 // pred_fallthru
          _
        %s376 = sand.u32 %s29, 1
        %s377 = scalar_lea.sflag [#allocation6], %s376
        %s378 = sand.u32 %s115, 1
        %s379 = smul.addr %s378, 96
        %s380 = scalar_lea.vmem [#allocation7], %s379
        // Predicated region
        $region45: #{tpu_custom_call.1} parent=35 // pred_check
          %p381 = pneg %p128
        $region46: #{tpu_custom_call.1} parent=35 // pred_check_branch
          %383 = sbr.rel (%p381) target = $region48
        $region47: #{tpu_custom_call.1} parent=35 // pred_region
          %385 = dma.done %s377, 1536
        $region48: #{tpu_custom_call.1} parent=35 // pred_fallthru
          _
        %s386 = smul.u32 4, %s29
        %p387 = scmp.lt.s32.totalorder %s386, 31
        %s388 = scalar_select %p387, %s386, 31
        %s389 = smul.addr %s388, 8
        %s390 = scalar_lea.vmem %s0, %s389
        %p391 = pneg %p50
        %p392 = pneg %p47
        %s393 = sand.u32 %s63, 1
        %s394 = scalar_lea.sflag [#allocation3], %s393
        %s395 = sand.u32 %s63, 1
        %s396 = smul.addr %s395, 96
        %s397 = scalar_lea.vmem [#allocation2], %s396
        %p398 = pneg %p76
        %p399 = pneg %p73
        %s400 = sand.u32 %s29, 1
        %s401 = scalar_lea.sflag [#allocation6], %s400
        %s402 = sand.u32 %s89, 1
        %s403 = smul.addr %s402, 192
        %s404 = scalar_lea.vmem [#allocation5], %s403
        %p405 = pneg %p102
        %p406 = pneg %p99
        %s407 = sand.u32 %s29, 1
        %s408 = scalar_lea.sflag [#allocation6], %s407
        %s409 = sand.u32 %s115, 1
        %s410 = smul.addr %s409, 96
        %s411 = scalar_lea.vmem [#allocation7], %s410
        %p412 = pneg %p128
        %p413 = pneg %p125
        %p414 = pneg %p154
        %p415 = pneg %p151
        %s416 = sand.u32 %s141, 1
        %s417 = scalar_lea.sflag [#allocation4], %s416
        %s418 = sand.u32 %s141, 1
        %s419 = smul.addr %s418, 96
        %s420 = scalar_lea.vmem [#allocation8], %s419
        %p421 = pneg %p180
        %p422 = pneg %p177
        %s423 = sand.u32 %s167, 1
        %s424 = scalar_lea.sflag [#allocation10], %s423
        %s425 = sand.u32 %s167, 1
        %s426 = smul.addr %s425, 96
        %s427 = scalar_lea.vmem [#allocation9], %s426
        %s428 = smul.u32 4, %s29
        %p429 = scmp.lt.s32.totalorder %s428, 31
        %s430 = scalar_select %p429, %s428, 31
        %s431 = smul.addr %s430, 8
        %s432 = scalar_lea.vmem %s0, %s431
        %s433 = smul.u32 4, %s29
        %s434 = smul.u32 4, %s29
        %s435 = smul.u32 4, %s29
        %s436 = smul.u32 4, %s29
        %s437 = smul.u32 4, %s29
        %s438 = smul.u32 4, %s29
        loop: start=0, step=1, limit=2
        $region49: #{tpu_custom_call.1} parent=35 // loop_pre_header
          _
        $region50: #{tpu_custom_call.1} parent=35 // loop_header
          %s440 = sphi 0, %s444
          %p441 = scmp.ge.s32.totalorder %s440, 2
        $region51: #{tpu_custom_call.1} parent=35 // loop_header_branch
          %443 = sbr.rel (%p441) target = $region55
        $region52: #{tpu_custom_call.1} parent=35 // loop_body
          %s445 = smul.u32 %s440, 16
          %s446 = scalar_lea.vmem %s432, %s445
          %v447 = vld [vmem:[%s446] sm:$0xff]
          %v448 = vld [vmem:[%s446 + $0x8] sm:$0xff]
          %450 = vset.pattern.permute.xlu0 0
          %451 = vperm.xlu0 %450, %v447
          %v452 = vpop.permute.xlu0 %451
          %455 = vset.pattern.permute.xlu0 0
          %456 = vperm.xlu0 %455, %v448
          %v457 = vpop.permute.xlu0 %456
          %s459 = scalar_lea.vmem %s360, %s445 [#allocation2]
          %v460 = vld [vmem:[%s459] sm:$0xff]
          %v461 = vld [vmem:[%s459 + $0x8] sm:$0xff]
          %s462 = sadd.s32 %s445, 32
          %s463 = scalar_lea.vmem %s360, %s462 [#allocation2]
          %v464 = vld [vmem:[%s463] sm:$0xff]
          %v465 = vld [vmem:[%s463 + $0x8] sm:$0xff]
          %s466 = sadd.s32 %s445, 64
          %s467 = scalar_lea.vmem %s360, %s466 [#allocation2]
          %v468 = vld [vmem:[%s467] sm:$0xff]
          %v469 = vld [vmem:[%s467 + $0x8] sm:$0xff]
          %s470 = sadd.s32 %s445, 96
          %s471 = scalar_lea.vmem %s370, %s470 [#allocation5]
          %v472 = vld [vmem:[%s471] sm:$0xff]
          %v473 = vld [vmem:[%s471 + $0x8] sm:$0xff]
          %s474 = sadd.s32 %s445, 128
          %s475 = scalar_lea.vmem %s370, %s474 [#allocation5]
          %v476 = vld [vmem:[%s475] sm:$0xff]
          %v477 = vld [vmem:[%s475 + $0x8] sm:$0xff]
          %s478 = sadd.s32 %s445, 160
          %s479 = scalar_lea.vmem %s370, %s478 [#allocation5]
          %v480 = vld [vmem:[%s479] sm:$0xff]
          %v481 = vld [vmem:[%s479 + $0x8] sm:$0xff]
          %s482 = scalar_lea.vmem %s370, %s445 [#allocation5]
          %v483 = vld [vmem:[%s482] sm:$0xff]
          %v484 = vld [vmem:[%s482 + $0x8] sm:$0xff]
          %v485 = vmul.f32 %v483, %v452
          %v486 = vmul.f32 %v484, %v457
          %s487 = scalar_lea.vmem %s370, %s462 [#allocation5]
          %v488 = vld [vmem:[%s487] sm:$0xff]
          %v489 = vld [vmem:[%s487 + $0x8] sm:$0xff]
          %v490 = vmul.f32 %v488, %v452
          %v491 = vmul.f32 %v489, %v457
          %s492 = scalar_lea.vmem %s370, %s466 [#allocation5]
          %v493 = vld [vmem:[%s492] sm:$0xff]
          %v494 = vld [vmem:[%s492 + $0x8] sm:$0xff]
          %v495 = vmul.f32 %v493, %v452
          %v496 = vmul.f32 %v494, %v457
          %v497 = vmul.f32 %v485, %v485
          %v498 = vmul.f32 %v486, %v486
          %v499 = vmul.f32 %v490, %v490
          %v500 = vmul.f32 %v491, %v491
          %v501 = vadd.f32 %v497, %v499
          %v502 = vadd.f32 %v498, %v500
          %v503 = vmul.f32 %v495, %v495
          %v504 = vmul.f32 %v496, %v496
          %v505 = vadd.f32 %v501, %v503
          %v506 = vadd.f32 %v502, %v504
          %vm507 = vcmp.lt.f32.partialorder %v505, 1e-08
          %vm508 = vcmp.lt.f32.partialorder %v506, 1e-08
          %v509 = vsel %vm507, 1.0, %v505
          %v510 = vsel %vm508, 1.0, %v506
          %v511 = vrsqrt.pop %v509
          %v512 = vmul.f32 %v511, %v509
          %v513 = vmul.f32 %v512, %v511
          %v514 = vmul.f32 0.5, %v513
          %v515 = vsub.f32 1.5, %v514
          %v516 = vmul.f32 %v511, %v515
          %vm517 = vweird.f32 %v509
          %vm518 = vweird.f32 %v511
          %vm519 = vmor %vm517, %vm518
          %v520 = vsel %vm519, %v511, %v516
          %v521 = vrsqrt.pop %v510
          %v522 = vmul.f32 %v521, %v510
          %v523 = vmul.f32 %v522, %v521
          %v524 = vmul.f32 0.5, %v523
          %v525 = vsub.f32 1.5, %v524
          %v526 = vmul.f32 %v521, %v525
          %vm527 = vweird.f32 %v510
          %vm528 = vweird.f32 %v521
          %vm529 = vmor %vm527, %vm528
          %v530 = vsel %vm529, %v521, %v526
          %v531 = vmul.f32 %v509, %v520
          %v532 = vmul.f32 %v510, %v530
          %v533 = vmul.f32 %v505, 0.16666667
          %v534 = vmul.f32 %v506, 0.16666667
          %v535 = vsub.f32 1.0, %v533
          %v536 = vsub.f32 1.0, %v534
          %v537 = vand.u32 2147483647, %v531
          %vm538 = vcmp.le.f32.partialorder %v537, 0.7853982
          %vm539 = vcmp.lt.s32.totalorder %v531, 0
          %v540 = vand.u32 %v531, 2139095040
          %v541 = vshrl.u32 %v540, 23
          %v542 = vsub.s32 %v541, 127
          %v543 = vand.u32 2147483647, %v531
          %v544 = vand.u32 %v543, 8388607
          %v545 = vor.u32 %v544, 8388608
          %v546 = vsub.s32 0, %v545
          %v547 = vadd.s32 %v542, 1
          %vm548 = vcmp.gt.s32.totalorder %v547, 0
          %v549 = vsel %vm548, %v547, 0
          %v550 = vshrl.u32 %v549, 5
          %v551 = vand.u32 %v549, 31
          %v552 = vsub.s32 32, %v551
          %v553 = vshrl.u32 683565275, %v552
          %v554 = vshll.u32 683565275, %v551
          %v555 = vshrl.u32 2475754826, %v552
          %v556 = vor.u32 %v554, %v555
          %v557 = vshll.u32 2475754826, %v551
          %v558 = vshrl.u32 2131351028, %v552
          %v559 = vor.u32 %v557, %v558
          %v560 = vshll.u32 2131351028, %v551
          %v561 = vshrl.u32 2102212464, %v552
          %v562 = vor.u32 %v560, %v561
          %v563 = vshll.u32 2102212464, %v551
          %v564 = vshrl.u32 920167782, %v552
          %v565 = vor.u32 %v563, %v564
          %v566 = vshll.u32 920167782, %v551
          %v567 = vshrl.u32 1326507024, %v552
          %v568 = vor.u32 %v566, %v567
          %vm569 = vcmp.lt.s32.totalorder %v550, 1
          %vm570 = vcmp.lt.s32.totalorder %v550, 2
          %vm571 = vcmp.lt.s32.totalorder %v550, 3
          %vm572 = vcmp.lt.s32.totalorder %v550, 4
          %v573 = vsel %vm569, %v553, %v556
          %v574 = vsel %vm572, %v562, 2102212464
          %v575 = vsel %vm571, %v559, %v574
          %v576 = vsel %vm570, %v573, %v575
          %v577 = vsel %vm569, %v556, %v559
          %v578 = vsel %vm572, %v565, 920167782
          %v579 = vsel %vm571, %v562, %v578
          %v580 = vsel %vm570, %v577, %v579
          %v581 = vsel %vm569, %v559, %v562
          %v582 = vsel %vm572, %v568, 1326507024
          %v583 = vsel %vm571, %v565, %v582
          %v584 = vsel %vm570, %v581, %v583
          %v585 = vshll.u32 %v545, 8
          %v586 = vand.u32 %v585, 65535
          %v587 = vshrl.u32 %v585, 16
          %v588 = vand.u32 %v584, 65535
          %v589 = vshrl.u32 %v584, 16
          %v590 = vmul.u32 %v586, %v588
          %v591 = vmul.u32 %v586, %v589
          %v592 = vmul.u32 %v587, %v588
          %v593 = vmul.u32 %v587, %v589
          %v594 = vshll.u32 %v591, 16
          %v595 = vshrl.u32 %v591, 16
          %v596 = vshll.u32 %v592, 16
          %v597 = vshrl.u32 %v592, 16
          %vm598 = vc.u32 %v590, %v594
          %v599 = vsel %vm598, 1, 0
          %v600 = vadd.s32 %v590, %v594
          %v601 = vadd.s32 %v593, %v599
          %vm602 = vc.u32 %v600, %v596
          %v603 = vsel %vm602, 1, 0
          %v604 = vadd.s32 %v600, %v596
          %v605 = vadd.s32 %v601, %v603
          %v606 = vadd.s32 %v605, %v595
          %v607 = vadd.s32 %v606, %v597
          %v608 = vand.u32 %v585, 65535
          %v609 = vshrl.u32 %v585, 16
          %v610 = vand.u32 %v580, 65535
          %v611 = vshrl.u32 %v580, 16
          %v612 = vmul.u32 %v608, %v610
          %v613 = vmul.u32 %v608, %v611
          %v614 = vmul.u32 %v609, %v610
          %v615 = vmul.u32 %v609, %v611
          %v616 = vshll.u32 %v613, 16
          %v617 = vshrl.u32 %v613, 16
          %v618 = vshll.u32 %v614, 16
          %v619 = vshrl.u32 %v614, 16
          %vm620 = vc.u32 %v612, %v616
          %v621 = vsel %vm620, 1, 0
          %v622 = vadd.s32 %v612, %v616
          %v623 = vadd.s32 %v615, %v621
          %vm624 = vc.u32 %v622, %v618
          %v625 = vsel %vm624, 1, 0
          %v626 = vadd.s32 %v622, %v618
          %v627 = vadd.s32 %v623, %v625
          %v628 = vadd.s32 %v627, %v617
          %v629 = vadd.s32 %v628, %v619
          %v630 = vmul.u32 %v585, %v576
          %v631 = vadd.s32 %v607, %v626
          %vm632 = vc.u32 %v607, %v626
          %v633 = vadd.s32 %v629, 1
          %v634 = vsel %vm632, %v633, %v629
          %v635 = vadd.s32 %v630, %v634
          %v636 = vadd.s32 %v635, 536870912
          %v637 = vshrl.u32 %v636, 30
          %v638 = vshll.u32 %v637, 30
          %v639 = vsub.s32 %v635, %v638
          %vm640 = vcmp.lt.s32.totalorder %v639, 0
          %v641 = vsub.s32 0, %v639
          %v642 = vsel %vm640, %v641, %v639
          %v643 = vclz %v642
          %v644 = vsub.s32 %v643, 2
          %vm645 = vcmp.gt.s32.totalorder 0, %v644
          %v646 = vsel %vm645, 0, %v644
          %v647 = vsub.s32 32, %v646
          %v648 = vshll.u32 %v639, %v646
          %v649 = vshrl.u32 %v631, %v647
          %v650 = vor.u32 %v648, %v649
          %v651 = vsub.s32 4294967266, %v646
          %v652 = vadd.s32 %v651, 127
          %v653 = vshll.u32 %v652, 23
          %v654 = vor.u32 4788187, %v653
          %v655 = vand.u32 2147483647, %v654
          %v657 = vcvt.s32.f32 %v650
          %v658 = vmul.f32 %v657, %v655
          %v659 = vxor.u32 %v658, 2147483648
          %v660 = vsel %vm539, %v659, %v658
          %v661 = vsub.s32 4, %v637
          %v662 = vsel %vm539, %v661, %v637
          %v663 = vsel %vm538, %v531, %v660
          %v664 = vsel %vm538, 0, %v662
          %v665 = vmul.f32 %v663, %v663
          %v666 = vmul.f32 %v665, -0.001358992
          %v667 = vadd.f32 %v666, 0.041655596
          %v668 = vmul.f32 %v665, %v667
          %v669 = vadd.f32 %v668, -0.4999988
          %v670 = vmul.f32 %v665, %v669
          %v671 = vadd.f32 1.0, %v670
          %v672 = vmul.f32 %v663, %v663
          %v673 = vmul.f32 %v672, -0.00019511016
          %v674 = vadd.f32 %v673, 0.008332121
          %v675 = vmul.f32 %v672, %v674
          %v676 = vadd.f32 %v675, -0.16666654
          %v677 = vmul.f32 %v672, %v676
          %v678 = vadd.f32 %v677, 1.0
          %v679 = vmul.f32 %v678, %v663
          %vm680 = vweird.f32 %v531
          %v681 = vadd.s32 %v664, 3
          %v682 = vand.u32 %v681, 3
          %vm683 = vcmp.lt.s32.totalorder %v682, 2
          %vm684 = vcmp.eq.s32.totalorder %v682, 0
          %v685 = vxor.u32 %v679, 2147483648
          %v686 = vsel %vm684, %v671, %v685
          %vm687 = vcmp.eq.s32.totalorder %v682, 2
          %v688 = vxor.u32 %v671, 2147483648
          %v689 = vsel %vm687, %v688, %v679
          %v690 = vsel %vm683, %v686, %v689
          %v691 = vsel %vm680, nan, %v690
          %v692 = vand.u32 2147483647, %v532
          %vm693 = vcmp.le.f32.partialorder %v692, 0.7853982
          %vm694 = vcmp.lt.s32.totalorder %v532, 0
          %v695 = vand.u32 %v532, 2139095040
          %v696 = vshrl.u32 %v695, 23
          %v697 = vsub.s32 %v696, 127
          %v698 = vand.u32 2147483647, %v532
          %v699 = vand.u32 %v698, 8388607
          %v700 = vor.u32 %v699, 8388608
          %v701 = vsub.s32 0, %v700
          %v702 = vadd.s32 %v697, 1
          %vm703 = vcmp.gt.s32.totalorder %v702, 0
          %v704 = vsel %vm703, %v702, 0
          %v705 = vshrl.u32 %v704, 5
          %v706 = vand.u32 %v704, 31
          %v707 = vsub.s32 32, %v706
          %v708 = vshrl.u32 683565275, %v707
          %v709 = vshll.u32 683565275, %v706
          %v710 = vshrl.u32 2475754826, %v707
          %v711 = vor.u32 %v709, %v710
          %v712 = vshll.u32 2475754826, %v706
          %v713 = vshrl.u32 2131351028, %v707
          %v714 = vor.u32 %v712, %v713
          %v715 = vshll.u32 2131351028, %v706
          %v716 = vshrl.u32 2102212464, %v707
          %v717 = vor.u32 %v715, %v716
          %v718 = vshll.u32 2102212464, %v706
          %v719 = vshrl.u32 920167782, %v707
          %v720 = vor.u32 %v718, %v719
          %v721 = vshll.u32 920167782, %v706
          %v722 = vshrl.u32 1326507024, %v707
          %v723 = vor.u32 %v721, %v722
          %vm724 = vcmp.lt.s32.totalorder %v705, 1
          %vm725 = vcmp.lt.s32.totalorder %v705, 2
          %vm726 = vcmp.lt.s32.totalorder %v705, 3
          %vm727 = vcmp.lt.s32.totalorder %v705, 4
          %v728 = vsel %vm724, %v708, %v711
          %v729 = vsel %vm727, %v717, 2102212464
          %v730 = vsel %vm726, %v714, %v729
          %v731 = vsel %vm725, %v728, %v730
          %v732 = vsel %vm724, %v711, %v714
          %v733 = vsel %vm727, %v720, 920167782
          %v734 = vsel %vm726, %v717, %v733
          %v735 = vsel %vm725, %v732, %v734
          %v736 = vsel %vm724, %v714, %v717
          %v737 = vsel %vm727, %v723, 1326507024
          %v738 = vsel %vm726, %v720, %v737
          %v739 = vsel %vm725, %v736, %v738
          %v740 = vshll.u32 %v700, 8
          %v741 = vand.u32 %v740, 65535
          %v742 = vshrl.u32 %v740, 16
          %v743 = vand.u32 %v739, 65535
          %v744 = vshrl.u32 %v739, 16
          %v745 = vmul.u32 %v741, %v743
          %v746 = vmul.u32 %v741, %v744
          %v747 = vmul.u32 %v742, %v743
          %v748 = vmul.u32 %v742, %v744
          %v749 = vshll.u32 %v746, 16
          %v750 = vshrl.u32 %v746, 16
          %v751 = vshll.u32 %v747, 16
          %v752 = vshrl.u32 %v747, 16
          %vm753 = vc.u32 %v745, %v749
          %v754 = vsel %vm753, 1, 0
          %v755 = vadd.s32 %v745, %v749
          %v756 = vadd.s32 %v748, %v754
          %vm757 = vc.u32 %v755, %v751
          %v758 = vsel %vm757, 1, 0
          %v759 = vadd.s32 %v755, %v751
          %v760 = vadd.s32 %v756, %v758
          %v761 = vadd.s32 %v760, %v750
          %v762 = vadd.s32 %v761, %v752
          %v763 = vand.u32 %v740, 65535
          %v764 = vshrl.u32 %v740, 16
          %v765 = vand.u32 %v735, 65535
          %v766 = vshrl.u32 %v735, 16
          %v767 = vmul.u32 %v763, %v765
          %v768 = vmul.u32 %v763, %v766
          %v769 = vmul.u32 %v764, %v765
          %v770 = vmul.u32 %v764, %v766
          %v771 = vshll.u32 %v768, 16
          %v772 = vshrl.u32 %v768, 16
          %v773 = vshll.u32 %v769, 16
          %v774 = vshrl.u32 %v769, 16
          %vm775 = vc.u32 %v767, %v771
          %v776 = vsel %vm775, 1, 0
          %v777 = vadd.s32 %v767, %v771
          %v778 = vadd.s32 %v770, %v776
          %vm779 = vc.u32 %v777, %v773
          %v780 = vsel %vm779, 1, 0
          %v781 = vadd.s32 %v777, %v773
          %v782 = vadd.s32 %v778, %v780
          %v783 = vadd.s32 %v782, %v772
          %v784 = vadd.s32 %v783, %v774
          %v785 = vmul.u32 %v740, %v731
          %v786 = vadd.s32 %v762, %v781
          %vm787 = vc.u32 %v762, %v781
          %v788 = vadd.s32 %v784, 1
          %v789 = vsel %vm787, %v788, %v784
          %v790 = vadd.s32 %v785, %v789
          %v791 = vadd.s32 %v790, 536870912
          %v792 = vshrl.u32 %v791, 30
          %v793 = vshll.u32 %v792, 30
          %v794 = vsub.s32 %v790, %v793
          %vm795 = vcmp.lt.s32.totalorder %v794, 0
          %v796 = vsub.s32 0, %v794
          %v797 = vsel %vm795, %v796, %v794
          %v798 = vclz %v797
          %v799 = vsub.s32 %v798, 2
          %vm800 = vcmp.gt.s32.totalorder 0, %v799
          %v801 = vsel %vm800, 0, %v799
          %v802 = vsub.s32 32, %v801
          %v803 = vshll.u32 %v794, %v801
          %v804 = vshrl.u32 %v786, %v802
          %v805 = vor.u32 %v803, %v804
          %v806 = vsub.s32 4294967266, %v801
          %v807 = vadd.s32 %v806, 127
          %v808 = vshll.u32 %v807, 23
          %v809 = vor.u32 4788187, %v808
          %v810 = vand.u32 2147483647, %v809
          %v812 = vcvt.s32.f32 %v805
          %v813 = vmul.f32 %v812, %v810
          %v814 = vxor.u32 %v813, 2147483648
          %v815 = vsel %vm694, %v814, %v813
          %v816 = vsub.s32 4, %v792
          %v817 = vsel %vm694, %v816, %v792
          %v818 = vsel %vm693, %v532, %v815
          %v819 = vsel %vm693, 0, %v817
          %v820 = vmul.f32 %v818, %v818
          %v821 = vmul.f32 %v820, -0.001358992
          %v822 = vadd.f32 %v821, 0.041655596
          %v823 = vmul.f32 %v820, %v822
          %v824 = vadd.f32 %v823, -0.4999988
          %v825 = vmul.f32 %v820, %v824
          %v826 = vadd.f32 1.0, %v825
          %v827 = vmul.f32 %v818, %v818
          %v828 = vmul.f32 %v827, -0.00019511016
          %v829 = vadd.f32 %v828, 0.008332121
          %v830 = vmul.f32 %v827, %v829
          %v831 = vadd.f32 %v830, -0.16666654
          %v832 = vmul.f32 %v827, %v831
          %v833 = vadd.f32 %v832, 1.0
          %v834 = vmul.f32 %v833, %v818
          %vm835 = vweird.f32 %v532
          %v836 = vadd.s32 %v819, 3
          %v837 = vand.u32 %v836, 3
          %vm838 = vcmp.lt.s32.totalorder %v837, 2
          %vm839 = vcmp.eq.s32.totalorder %v837, 0
          %v840 = vxor.u32 %v834, 2147483648
          %v841 = vsel %vm839, %v826, %v840
          %vm842 = vcmp.eq.s32.totalorder %v837, 2
          %v843 = vxor.u32 %v826, 2147483648
          %v844 = vsel %vm842, %v843, %v834
          %v845 = vsel %vm838, %v841, %v844
          %v846 = vsel %vm835, nan, %v845
          %v847 = vmul.f32 %v691, %v520
          %v848 = vmul.f32 %v846, %v530
          %v849 = vsel %vm507, %v535, %v847
          %v850 = vsel %vm508, %v536, %v848
          %v851 = vmul.f32 %v505, 0.041666668
          %v852 = vmul.f32 %v506, 0.041666668
          %v853 = vsub.f32 0.5, %v851
          %v854 = vsub.f32 0.5, %v852
          %v855 = vand.u32 2147483647, %v531
          %vm856 = vcmp.le.f32.partialorder %v855, 0.7853982
          %vm857 = vcmp.lt.s32.totalorder %v531, 0
          %v858 = vand.u32 %v531, 2139095040
          %v859 = vshrl.u32 %v858, 23
          %v860 = vsub.s32 %v859, 127
          %v861 = vand.u32 2147483647, %v531
          %v862 = vand.u32 %v861, 8388607
          %v863 = vor.u32 %v862, 8388608
          %v864 = vsub.s32 0, %v863
          %v865 = vadd.s32 %v860, 1
          %vm866 = vcmp.gt.s32.totalorder %v865, 0
          %v867 = vsel %vm866, %v865, 0
          %v868 = vshrl.u32 %v867, 5
          %v869 = vand.u32 %v867, 31
          %v870 = vsub.s32 32, %v869
          %v871 = vshrl.u32 683565275, %v870
          %v872 = vshll.u32 683565275, %v869
          %v873 = vshrl.u32 2475754826, %v870
          %v874 = vor.u32 %v872, %v873
          %v875 = vshll.u32 2475754826, %v869
          %v876 = vshrl.u32 2131351028, %v870
          %v877 = vor.u32 %v875, %v876
          %v878 = vshll.u32 2131351028, %v869
          %v879 = vshrl.u32 2102212464, %v870
          %v880 = vor.u32 %v878, %v879
          %v881 = vshll.u32 2102212464, %v869
          %v882 = vshrl.u32 920167782, %v870
          %v883 = vor.u32 %v881, %v882
          %v884 = vshll.u32 920167782, %v869
          %v885 = vshrl.u32 1326507024, %v870
          %v886 = vor.u32 %v884, %v885
          %vm887 = vcmp.lt.s32.totalorder %v868, 1
          %vm888 = vcmp.lt.s32.totalorder %v868, 2
          %vm889 = vcmp.lt.s32.totalorder %v868, 3
          %vm890 = vcmp.lt.s32.totalorder %v868, 4
          %v891 = vsel %vm887, %v871, %v874
          %v892 = vsel %vm890, %v880, 2102212464
          %v893 = vsel %vm889, %v877, %v892
          %v894 = vsel %vm888, %v891, %v893
          %v895 = vsel %vm887, %v874, %v877
          %v896 = vsel %vm890, %v883, 920167782
          %v897 = vsel %vm889, %v880, %v896
          %v898 = vsel %vm888, %v895, %v897
          %v899 = vsel %vm887, %v877, %v880
          %v900 = vsel %vm890, %v886, 1326507024
          %v901 = vsel %vm889, %v883, %v900
          %v902 = vsel %vm888, %v899, %v901
          %v903 = vshll.u32 %v863, 8
          %v904 = vand.u32 %v903, 65535
          %v905 = vshrl.u32 %v903, 16
          %v906 = vand.u32 %v902, 65535
          %v907 = vshrl.u32 %v902, 16
          %v908 = vmul.u32 %v904, %v906
          %v909 = vmul.u32 %v904, %v907
          %v910 = vmul.u32 %v905, %v906
          %v911 = vmul.u32 %v905, %v907
          %v912 = vshll.u32 %v909, 16
          %v913 = vshrl.u32 %v909, 16
          %v914 = vshll.u32 %v910, 16
          %v915 = vshrl.u32 %v910, 16
          %vm916 = vc.u32 %v908, %v912
          %v917 = vsel %vm916, 1, 0
          %v918 = vadd.s32 %v908, %v912
          %v919 = vadd.s32 %v911, %v917
          %vm920 = vc.u32 %v918, %v914
          %v921 = vsel %vm920, 1, 0
          %v922 = vadd.s32 %v918, %v914
          %v923 = vadd.s32 %v919, %v921
          %v924 = vadd.s32 %v923, %v913
          %v925 = vadd.s32 %v924, %v915
          %v926 = vand.u32 %v903, 65535
          %v927 = vshrl.u32 %v903, 16
          %v928 = vand.u32 %v898, 65535
          %v929 = vshrl.u32 %v898, 16
          %v930 = vmul.u32 %v926, %v928
          %v931 = vmul.u32 %v926, %v929
          %v932 = vmul.u32 %v927, %v928
          %v933 = vmul.u32 %v927, %v929
          %v934 = vshll.u32 %v931, 16
          %v935 = vshrl.u32 %v931, 16
          %v936 = vshll.u32 %v932, 16
          %v937 = vshrl.u32 %v932, 16
          %vm938 = vc.u32 %v930, %v934
          %v939 = vsel %vm938, 1, 0
          %v940 = vadd.s32 %v930, %v934
          %v941 = vadd.s32 %v933, %v939
          %vm942 = vc.u32 %v940, %v936
          %v943 = vsel %vm942, 1, 0
          %v944 = vadd.s32 %v940, %v936
          %v945 = vadd.s32 %v941, %v943
          %v946 = vadd.s32 %v945, %v935
          %v947 = vadd.s32 %v946, %v937
          %v948 = vmul.u32 %v903, %v894
          %v949 = vadd.s32 %v925, %v944
          %vm950 = vc.u32 %v925, %v944
          %v951 = vadd.s32 %v947, 1
          %v952 = vsel %vm950, %v951, %v947
          %v953 = vadd.s32 %v948, %v952
          %v954 = vadd.s32 %v953, 536870912
          %v955 = vshrl.u32 %v954, 30
          %v956 = vshll.u32 %v955, 30
          %v957 = vsub.s32 %v953, %v956
          %vm958 = vcmp.lt.s32.totalorder %v957, 0
          %v959 = vsub.s32 0, %v957
          %v960 = vsel %vm958, %v959, %v957
          %v961 = vclz %v960
          %v962 = vsub.s32 %v961, 2
          %vm963 = vcmp.gt.s32.totalorder 0, %v962
          %v964 = vsel %vm963, 0, %v962
          %v965 = vsub.s32 32, %v964
          %v966 = vshll.u32 %v957, %v964
          %v967 = vshrl.u32 %v949, %v965
          %v968 = vor.u32 %v966, %v967
          %v969 = vsub.s32 4294967266, %v964
          %v970 = vadd.s32 %v969, 127
          %v971 = vshll.u32 %v970, 23
          %v972 = vor.u32 4788187, %v971
          %v973 = vand.u32 2147483647, %v972
          %v975 = vcvt.s32.f32 %v968
          %v976 = vmul.f32 %v975, %v973
          %v977 = vxor.u32 %v976, 2147483648
          %v978 = vsel %vm857, %v977, %v976
          %v979 = vsub.s32 4, %v955
          %v980 = vsel %vm857, %v979, %v955
          %v981 = vsel %vm856, %v531, %v978
          %v982 = vsel %vm856, 0, %v980
          %v983 = vmul.f32 %v981, %v981
          %v984 = vmul.f32 %v983, -0.001358992
          %v985 = vadd.f32 %v984, 0.041655596
          %v986 = vmul.f32 %v983, %v985
          %v987 = vadd.f32 %v986, -0.4999988
          %v988 = vmul.f32 %v983, %v987
          %v989 = vadd.f32 1.0, %v988
          %v990 = vmul.f32 %v981, %v981
          %v991 = vmul.f32 %v990, -0.00019511016
          %v992 = vadd.f32 %v991, 0.008332121
          %v993 = vmul.f32 %v990, %v992
          %v994 = vadd.f32 %v993, -0.16666654
          %v995 = vmul.f32 %v990, %v994
          %v996 = vadd.f32 %v995, 1.0
          %v997 = vmul.f32 %v996, %v981
          %vm998 = vweird.f32 %v531
          %v999 = vand.u32 %v982, 3
          %vm1000 = vcmp.lt.s32.totalorder %v999, 2
          %vm1001 = vcmp.eq.s32.totalorder %v999, 0
          %v1002 = vxor.u32 %v997, 2147483648
          %v1003 = vsel %vm1001, %v989, %v1002
          %vm1004 = vcmp.eq.s32.totalorder %v999, 2
          %v1005 = vxor.u32 %v989, 2147483648
          %v1006 = vsel %vm1004, %v1005, %v997
          %v1007 = vsel %vm1000, %v1003, %v1006
          %v1008 = vsel %vm998, nan, %v1007
          %v1009 = vand.u32 2147483647, %v532
          %vm1010 = vcmp.le.f32.partialorder %v1009, 0.7853982
          %vm1011 = vcmp.lt.s32.totalorder %v532, 0
          %v1012 = vand.u32 %v532, 2139095040
          %v1013 = vshrl.u32 %v1012, 23
          %v1014 = vsub.s32 %v1013, 127
          %v1015 = vand.u32 2147483647, %v532
          %v1016 = vand.u32 %v1015, 8388607
          %v1017 = vor.u32 %v1016, 8388608
          %v1018 = vsub.s32 0, %v1017
          %v1019 = vadd.s32 %v1014, 1
          %vm1020 = vcmp.gt.s32.totalorder %v1019, 0
          %v1021 = vsel %vm1020, %v1019, 0
          %v1022 = vshrl.u32 %v1021, 5
          %v1023 = vand.u32 %v1021, 31
          %v1024 = vsub.s32 32, %v1023
          %v1025 = vshrl.u32 683565275, %v1024
          %v1026 = vshll.u32 683565275, %v1023
          %v1027 = vshrl.u32 2475754826, %v1024
          %v1028 = vor.u32 %v1026, %v1027
          %v1029 = vshll.u32 2475754826, %v1023
          %v1030 = vshrl.u32 2131351028, %v1024
          %v1031 = vor.u32 %v1029, %v1030
          %v1032 = vshll.u32 2131351028, %v1023
          %v1033 = vshrl.u32 2102212464, %v1024
          %v1034 = vor.u32 %v1032, %v1033
          %v1035 = vshll.u32 2102212464, %v1023
          %v1036 = vshrl.u32 920167782, %v1024
          %v1037 = vor.u32 %v1035, %v1036
          %v1038 = vshll.u32 920167782, %v1023
          %v1039 = vshrl.u32 1326507024, %v1024
          %v1040 = vor.u32 %v1038, %v1039
          %vm1041 = vcmp.lt.s32.totalorder %v1022, 1
          %vm1042 = vcmp.lt.s32.totalorder %v1022, 2
          %vm1043 = vcmp.lt.s32.totalorder %v1022, 3
          %vm1044 = vcmp.lt.s32.totalorder %v1022, 4
          %v1045 = vsel %vm1041, %v1025, %v1028
          %v1046 = vsel %vm1044, %v1034, 2102212464
          %v1047 = vsel %vm1043, %v1031, %v1046
          %v1048 = vsel %vm1042, %v1045, %v1047
          %v1049 = vsel %vm1041, %v1028, %v1031
          %v1050 = vsel %vm1044, %v1037, 920167782
          %v1051 = vsel %vm1043, %v1034, %v1050
          %v1052 = vsel %vm1042, %v1049, %v1051
          %v1053 = vsel %vm1041, %v1031, %v1034
          %v1054 = vsel %vm1044, %v1040, 1326507024
          %v1055 = vsel %vm1043, %v1037, %v1054
          %v1056 = vsel %vm1042, %v1053, %v1055
          %v1057 = vshll.u32 %v1017, 8
          %v1058 = vand.u32 %v1057, 65535
          %v1059 = vshrl.u32 %v1057, 16
          %v1060 = vand.u32 %v1056, 65535
          %v1061 = vshrl.u32 %v1056, 16
          %v1062 = vmul.u32 %v1058, %v1060
          %v1063 = vmul.u32 %v1058, %v1061
          %v1064 = vmul.u32 %v1059, %v1060
          %v1065 = vmul.u32 %v1059, %v1061
          %v1066 = vshll.u32 %v1063, 16
          %v1067 = vshrl.u32 %v1063, 16
          %v1068 = vshll.u32 %v1064, 16
          %v1069 = vshrl.u32 %v1064, 16
          %vm1070 = vc.u32 %v1062, %v1066
          %v1071 = vsel %vm1070, 1, 0
          %v1072 = vadd.s32 %v1062, %v1066
          %v1073 = vadd.s32 %v1065, %v1071
          %vm1074 = vc.u32 %v1072, %v1068
          %v1075 = vsel %vm1074, 1, 0
          %v1076 = vadd.s32 %v1072, %v1068
          %v1077 = vadd.s32 %v1073, %v1075
          %v1078 = vadd.s32 %v1077, %v1067
          %v1079 = vadd.s32 %v1078, %v1069
          %v1080 = vand.u32 %v1057, 65535
          %v1081 = vshrl.u32 %v1057, 16
          %v1082 = vand.u32 %v1052, 65535
          %v1083 = vshrl.u32 %v1052, 16
          %v1084 = vmul.u32 %v1080, %v1082
          %v1085 = vmul.u32 %v1080, %v1083
          %v1086 = vmul.u32 %v1081, %v1082
          %v1087 = vmul.u32 %v1081, %v1083
          %v1088 = vshll.u32 %v1085, 16
          %v1089 = vshrl.u32 %v1085, 16
          %v1090 = vshll.u32 %v1086, 16
          %v1091 = vshrl.u32 %v1086, 16
          %vm1092 = vc.u32 %v1084, %v1088
          %v1093 = vsel %vm1092, 1, 0
          %v1094 = vadd.s32 %v1084, %v1088
          %v1095 = vadd.s32 %v1087, %v1093
          %vm1096 = vc.u32 %v1094, %v1090
          %v1097 = vsel %vm1096, 1, 0
          %v1098 = vadd.s32 %v1094, %v1090
          %v1099 = vadd.s32 %v1095, %v1097
          %v1100 = vadd.s32 %v1099, %v1089
          %v1101 = vadd.s32 %v1100, %v1091
          %v1102 = vmul.u32 %v1057, %v1048
          %v1103 = vadd.s32 %v1079, %v1098
          %vm1104 = vc.u32 %v1079, %v1098
          %v1105 = vadd.s32 %v1101, 1
          %v1106 = vsel %vm1104, %v1105, %v1101
          %v1107 = vadd.s32 %v1102, %v1106
          %v1108 = vadd.s32 %v1107, 536870912
          %v1109 = vshrl.u32 %v1108, 30
          %v1110 = vshll.u32 %v1109, 30
          %v1111 = vsub.s32 %v1107, %v1110
          %vm1112 = vcmp.lt.s32.totalorder %v1111, 0
          %v1113 = vsub.s32 0, %v1111
          %v1114 = vsel %vm1112, %v1113, %v1111
          %v1115 = vclz %v1114
          %v1116 = vsub.s32 %v1115, 2
          %vm1117 = vcmp.gt.s32.totalorder 0, %v1116
          %v1118 = vsel %vm1117, 0, %v1116
          %v1119 = vsub.s32 32, %v1118
          %v1120 = vshll.u32 %v1111, %v1118
          %v1121 = vshrl.u32 %v1103, %v1119
          %v1122 = vor.u32 %v1120, %v1121
          %v1123 = vsub.s32 4294967266, %v1118
          %v1124 = vadd.s32 %v1123, 127
          %v1125 = vshll.u32 %v1124, 23
          %v1126 = vor.u32 4788187, %v1125
          %v1127 = vand.u32 2147483647, %v1126
          %v1129 = vcvt.s32.f32 %v1122
          %v1130 = vmul.f32 %v1129, %v1127
          %v1131 = vxor.u32 %v1130, 2147483648
          %v1132 = vsel %vm1011, %v1131, %v1130
          %v1133 = vsub.s32 4, %v1109
          %v1134 = vsel %vm1011, %v1133, %v1109
          %v1135 = vsel %vm1010, %v532, %v1132
          %v1136 = vsel %vm1010, 0, %v1134
          %v1137 = vmul.f32 %v1135, %v1135
          %v1138 = vmul.f32 %v1137, -0.001358992
          %v1139 = vadd.f32 %v1138, 0.041655596
          %v1140 = vmul.f32 %v1137, %v1139
          %v1141 = vadd.f32 %v1140, -0.4999988
          %v1142 = vmul.f32 %v1137, %v1141
          %v1143 = vadd.f32 1.0, %v1142
          %v1144 = vmul.f32 %v1135, %v1135
          %v1145 = vmul.f32 %v1144, -0.00019511016
          %v1146 = vadd.f32 %v1145, 0.008332121
          %v1147 = vmul.f32 %v1144, %v1146
          %v1148 = vadd.f32 %v1147, -0.16666654
          %v1149 = vmul.f32 %v1144, %v1148
          %v1150 = vadd.f32 %v1149, 1.0
          %v1151 = vmul.f32 %v1150, %v1135
          %vm1152 = vweird.f32 %v532
          %v1153 = vand.u32 %v1136, 3
          %vm1154 = vcmp.lt.s32.totalorder %v1153, 2
          %vm1155 = vcmp.eq.s32.totalorder %v1153, 0
          %v1156 = vxor.u32 %v1151, 2147483648
          %v1157 = vsel %vm1155, %v1143, %v1156
          %vm1158 = vcmp.eq.s32.totalorder %v1153, 2
          %v1159 = vxor.u32 %v1143, 2147483648
          %v1160 = vsel %vm1158, %v1159, %v1151
          %v1161 = vsel %vm1154, %v1157, %v1160
          %v1162 = vsel %vm1152, nan, %v1161
          %v1163 = vsub.f32 1.0, %v1008
          %v1164 = vsub.f32 1.0, %v1162
          %v1165 = vmul.f32 %v520, %v520
          %v1166 = vmul.f32 %v530, %v530
          %v1167 = vmul.f32 %v1163, %v1165
          %v1168 = vmul.f32 %v1164, %v1166
          %v1169 = vsel %vm507, %v853, %v1167
          %v1170 = vsel %vm508, %v854, %v1168
          %v1171 = vsub.f32 %v460, %v472
          %v1172 = vsub.f32 %v461, %v473
          %v1173 = vsub.f32 %v464, %v476
          %v1174 = vsub.f32 %v465, %v477
          %v1175 = vsub.f32 %v468, %v480
          %v1176 = vsub.f32 %v469, %v481
          %v1177 = vmul.f32 %v490, %v1175
          %v1178 = vmul.f32 %v491, %v1176
          %v1179 = vmul.f32 %v495, %v1173
          %v1180 = vmul.f32 %v496, %v1174
          %v1181 = vsub.f32 %v1177, %v1179
          %v1182 = vsub.f32 %v1178, %v1180
          %v1183 = vmul.f32 %v495, %v1171
          %v1184 = vmul.f32 %v496, %v1172
          %v1185 = vmul.f32 %v485, %v1175
          %v1186 = vmul.f32 %v486, %v1176
          %v1187 = vsub.f32 %v1183, %v1185
          %v1188 = vsub.f32 %v1184, %v1186
          %v1189 = vmul.f32 %v485, %v1173
          %v1190 = vmul.f32 %v486, %v1174
          %v1191 = vmul.f32 %v490, %v1171
          %v1192 = vmul.f32 %v491, %v1172
          %v1193 = vsub.f32 %v1189, %v1191
          %v1194 = vsub.f32 %v1190, %v1192
          %v1195 = vmul.f32 %v490, %v1193
          %v1196 = vmul.f32 %v491, %v1194
          %v1197 = vmul.f32 %v495, %v1187
          %v1198 = vmul.f32 %v496, %v1188
          %v1199 = vsub.f32 %v1195, %v1197
          %v1200 = vsub.f32 %v1196, %v1198
          %v1201 = vmul.f32 %v495, %v1181
          %v1202 = vmul.f32 %v496, %v1182
          %v1203 = vmul.f32 %v485, %v1193
          %v1204 = vmul.f32 %v486, %v1194
          %v1205 = vsub.f32 %v1201, %v1203
          %v1206 = vsub.f32 %v1202, %v1204
          %v1207 = vmul.f32 %v485, %v1187
          %v1208 = vmul.f32 %v486, %v1188
          %v1209 = vmul.f32 %v490, %v1181
          %v1210 = vmul.f32 %v491, %v1182
          %v1211 = vsub.f32 %v1207, %v1209
          %v1212 = vsub.f32 %v1208, %v1210
          %v1213 = vmul.f32 %v849, %v1181
          %v1214 = vmul.f32 %v850, %v1182
          %v1215 = vmul.f32 %v1169, %v1199
          %v1216 = vmul.f32 %v1170, %v1200
          %v1217 = vadd.f32 %v1213, %v1215
          %v1218 = vadd.f32 %v1214, %v1216
          %s1219 = scalar_lea.vmem %s380, %s445 [#allocation7]
          %v1220 = vld [vmem:[%s1219] sm:$0xff]
          %v1221 = vld [vmem:[%s1219 + $0x8] sm:$0xff]
          %v1222 = vmul.f32 %v1220, %v452
          %v1223 = vmul.f32 %v1221, %v457
          %v1224 = vadd.f32 %v1217, %v1222
          %v1225 = vadd.f32 %v1218, %v1223
          %v1226 = vmul.f32 %v849, %v1187
          %v1227 = vmul.f32 %v850, %v1188
          %v1228 = vmul.f32 %v1169, %v1205
          %v1229 = vmul.f32 %v1170, %v1206
          %v1230 = vadd.f32 %v1226, %v1228
          %v1231 = vadd.f32 %v1227, %v1229
          %s1232 = scalar_lea.vmem %s380, %s462 [#allocation7]
          %v1233 = vld [vmem:[%s1232] sm:$0xff]
          %v1234 = vld [vmem:[%s1232 + $0x8] sm:$0xff]
          %v1235 = vmul.f32 %v1233, %v452
          %v1236 = vmul.f32 %v1234, %v457
          %v1237 = vadd.f32 %v1230, %v1235
          %v1238 = vadd.f32 %v1231, %v1236
          %v1239 = vmul.f32 %v849, %v1193
          %v1240 = vmul.f32 %v850, %v1194
          %v1241 = vmul.f32 %v1169, %v1211
          %v1242 = vmul.f32 %v1170, %v1212
          %v1243 = vadd.f32 %v1239, %v1241
          %v1244 = vadd.f32 %v1240, %v1242
          %s1245 = scalar_lea.vmem %s380, %s466 [#allocation7]
          %v1246 = vld [vmem:[%s1245] sm:$0xff]
          %v1247 = vld [vmem:[%s1245 + $0x8] sm:$0xff]
          %v1248 = vmul.f32 %v1246, %v452
          %v1249 = vmul.f32 %v1247, %v457
          %v1250 = vadd.f32 %v1243, %v1248
          %v1251 = vadd.f32 %v1244, %v1249
          %v1252 = vadd.f32 %v460, %v1224
          %v1253 = vadd.f32 %v461, %v1225
          %s1254 = scalar_lea.vmem %s420, %s445 [#allocation8]
          %1255 = vst [vmem:[%s1254] sm:$0xff] %v1252
          %1256 = vst [vmem:[%s1254 + $0x8] sm:$0xff] %v1253
          %v1257 = vadd.f32 %v464, %v1237
          %v1258 = vadd.f32 %v465, %v1238
          %s1259 = scalar_lea.vmem %s420, %s462 [#allocation8]
          %1260 = vst [vmem:[%s1259] sm:$0xff] %v1257
          %1261 = vst [vmem:[%s1259 + $0x8] sm:$0xff] %v1258
          %v1262 = vadd.f32 %v468, %v1250
          %v1263 = vadd.f32 %v469, %v1251
          %s1264 = scalar_lea.vmem %s420, %s466 [#allocation8]
          %1265 = vst [vmem:[%s1264] sm:$0xff] %v1262
          %1266 = vst [vmem:[%s1264 + $0x8] sm:$0xff] %v1263
          %v1267 = vsub.f32 0.0, %v1224
          %v1268 = vsub.f32 0.0, %v1225
          %s1269 = scalar_lea.vmem %s427, %s445 [#allocation9]
          %1270 = vst [vmem:[%s1269] sm:$0xff] %v1267
          %1271 = vst [vmem:[%s1269 + $0x8] sm:$0xff] %v1268
          %v1272 = vsub.f32 0.0, %v1237
          %v1273 = vsub.f32 0.0, %v1238
          %s1274 = scalar_lea.vmem %s427, %s462 [#allocation9]
          %1275 = vst [vmem:[%s1274] sm:$0xff] %v1272
          %1276 = vst [vmem:[%s1274 + $0x8] sm:$0xff] %v1273
          %v1277 = vsub.f32 0.0, %v1250
          %v1278 = vsub.f32 0.0, %v1251
          %s1279 = scalar_lea.vmem %s427, %s466 [#allocation9]
          %1280 = vst [vmem:[%s1279] sm:$0xff] %v1277
          %1281 = vst [vmem:[%s1279 + $0x8] sm:$0xff] %v1278
        $region53: #{tpu_custom_call.1} parent=35 // loop_footer
          %s444 = sadd.s32 1, %s440
        $region54: #{tpu_custom_call.1} parent=35 // loop_footer_branch
          %439 = sbr.rel target = $region50
        $region55: #{tpu_custom_call.1} parent=35 // loop_exit
          _
        %s1282 = sand.u32 %s141, 1
        %s1283 = scalar_lea.sflag [#allocation4], %s1282
        %s1284 = sand.u32 %s141, 1
        %s1285 = smul.addr %s1284, 96
        %s1286 = scalar_lea.vmem [#allocation8], %s1285
        %s1287 = sand.u32 %s167, 1
        %s1288 = scalar_lea.sflag [#allocation10], %s1287
        %s1289 = sand.u32 %s167, 1
        %s1290 = smul.addr %s1289, 96
        %s1291 = scalar_lea.vmem [#allocation9], %s1290
        // Predicated region
        $region56: #{tpu_custom_call.1} parent=35 // pred_check
          %p1292 = pneg %p151
        $region57: #{tpu_custom_call.1} parent=35 // pred_check_branch
          %1294 = sbr.rel (%p1292) target = $region59
        $region58: #{tpu_custom_call.1} parent=35 // pred_region
          #allocation18 [shape = 'u32[6]{0}', space=smem, size = 0x18, scoped, tag = 'DMA stride descriptor']
          %s1295 = smul.u32 4, %s29
          %1297 = vsyncadd %s1283, 0
          %s1298 = smul.addr %s1295, 8
          %s1299 = scalar_lea.hbm %s4, %s1298
          %s1301 = sshll.u32 1, 14
          %s1302 = sxor.u32 4294967295, %s1301
          %s1305 = sshll.u32 7, 18
          %s1306 = sxor.u32 4294967295, %s1305
          %s1307 = sand.u32 0, %s1306
          %s1309 = sor.u32 %s1307, 0
          %s1310 = sshll.u32 %s1286, 4
          %s1311 = int_to_ptr.vmem [resolvable:$true] %s1310
          %s1312 = sshll.u32 %s1299, 4
          %s1313 = int_to_ptr.hbm [resolvable:$true] %s1312
          %1319 = sst [smem:[#allocation18]] 512
          %s1320 = scalar_lea.smem [#allocation18], 1
          %1321 = sst [smem:[%s1320]] 4096
          %s1322 = scalar_lea.smem [#allocation18], 2
          %1323 = sst [smem:[%s1322]] 4
          %s1324 = scalar_lea.smem [#allocation18], 3
          %1325 = sst [smem:[%s1324]] 128
          %s1326 = scalar_lea.smem [#allocation18], 4
          %1327 = sst [smem:[%s1326]] 128
          %s1328 = scalar_lea.smem [#allocation18], 5
          %1329 = sst [smem:[%s1328]] 8
          %1331 = dma.general %s1311, 1536, %s1313, %s1283, [#allocation17], [#allocation18], %s1309, 0
        $region59: #{tpu_custom_call.1} parent=35 // pred_fallthru
          _
        // Predicated region
        $region60: #{tpu_custom_call.1} parent=35 // pred_check
          %p1332 = pneg %p177
        $region61: #{tpu_custom_call.1} parent=35 // pred_check_branch
          %1334 = sbr.rel (%p1332) target = $region63
        $region62: #{tpu_custom_call.1} parent=35 // pred_region
          #allocation20 [shape = 'u32[6]{0}', space=smem, size = 0x18, scoped, tag = 'DMA stride descriptor']
          %s1335 = smul.u32 4, %s29
          %1337 = vsyncadd %s1288, 0
          %s1338 = smul.addr %s1335, 8
          %s1339 = scalar_lea.hbm %s5, %s1338
          %s1341 = sshll.u32 1, 14
          %s1342 = sxor.u32 4294967295, %s1341
          %s1345 = sshll.u32 7, 18
          %s1346 = sxor.u32 4294967295, %s1345
          %s1347 = sand.u32 0, %s1346
          %s1349 = sor.u32 %s1347, 0
          %s1350 = sshll.u32 %s1291, 4
          %s1351 = int_to_ptr.vmem [resolvable:$true] %s1350
          %s1352 = sshll.u32 %s1339, 4
          %s1353 = int_to_ptr.hbm [resolvable:$true] %s1352
          %1359 = sst [smem:[#allocation20]] 512
          %s1360 = scalar_lea.smem [#allocation20], 1
          %1361 = sst [smem:[%s1360]] 4096
          %s1362 = scalar_lea.smem [#allocation20], 2
          %1363 = sst [smem:[%s1362]] 4
          %s1364 = scalar_lea.smem [#allocation20], 3
          %1365 = sst [smem:[%s1364]] 128
          %s1366 = scalar_lea.smem [#allocation20], 4
          %1367 = sst [smem:[%s1366]] 128
          %s1368 = scalar_lea.smem [#allocation20], 5
          %1369 = sst [smem:[%s1368]] 8
          %1371 = dma.general %s1351, 1536, %s1353, %s1288, [#allocation19], [#allocation20], %s1349, 0
        $region63: #{tpu_custom_call.1} parent=35 // pred_fallthru
          _
      $region36: #{tpu_custom_call.1} parent=5 // pred_fallthru
        _
      %p1372 = scmp.le.s32.totalorder 2, %s24
      // Predicated region
      $region64: #{tpu_custom_call.1} parent=5 // pred_check
        %p1373 = pneg %p1372
      $region65: #{tpu_custom_call.1} parent=5 // pred_check_branch
        %1375 = sbr.rel (%p1373) target = $region67
      $region66: #{tpu_custom_call.1} parent=5 // pred_region
        %s1376 = ssub.s32 %s24, 2
        // Predicated region
        $region68: #{tpu_custom_call.1} parent=66 // pred_check
          %p1377 = pneg %p157
        $region69: #{tpu_custom_call.1} parent=66 // pred_check_branch
          %1379 = sbr.rel (%p1377) target = $region71
        $region70: #{tpu_custom_call.1} parent=66 // pred_region
          %s1380 = sand.u32 %s142, 1
          %s1381 = scalar_lea.sflag [#allocation4], %s1380
          %s1382 = sand.u32 %s142, 1
          %s1383 = smul.addr %s1382, 96
          %s1384 = scalar_lea.vmem [#allocation8], %s1383
          %1386 = dma.done %s1381, 1536
        $region71: #{tpu_custom_call.1} parent=66 // pred_fallthru
          _
        // Predicated region
        $region72: #{tpu_custom_call.1} parent=66 // pred_check
          %p1387 = pneg %p183
        $region73: #{tpu_custom_call.1} parent=66 // pred_check_branch
          %1389 = sbr.rel (%p1387) target = $region75
        $region74: #{tpu_custom_call.1} parent=66 // pred_region
          %s1390 = sand.u32 %s168, 1
          %s1391 = scalar_lea.sflag [#allocation10], %s1390
          %s1392 = sand.u32 %s168, 1
          %s1393 = smul.addr %s1392, 96
          %s1394 = scalar_lea.vmem [#allocation9], %s1393
          %1396 = dma.done %s1391, 1536
        $region75: #{tpu_custom_call.1} parent=66 // pred_fallthru
          _
      $region67: #{tpu_custom_call.1} parent=5 // pred_fallthru
        _
    $region6: #{tpu_custom_call.1} parent=1 // loop_footer
      %s28 = sadd.s32 1, %s24
    $region7: #{tpu_custom_call.1} parent=1 // loop_footer_branch
      %23 = sbr.rel target = $region3
    $region8: #{tpu_custom_call.1} parent=1 // loop_exit
      _
    %1397 = vsyncpa [#allocation3], 1
    %s1398 = scalar_lea.sflag [#allocation3], 1
    %1399 = vsyncpa %s1398, 1
    %1400 = vsyncpa [#allocation6], 1
    %s1401 = scalar_lea.sflag [#allocation6], 1
    %1402 = vsyncpa %s1401, 1
    %1403 = vsyncpa [#allocation4], 1
    %s1404 = scalar_lea.sflag [#allocation4], 1
    %1405 = vsyncpa %s1404, 1
    %1406 = vsyncpa [#allocation10], 1
    %s1407 = scalar_lea.sflag [#allocation10], 1
    %1408 = vsyncpa %s1407, 1

</llo_original>
